<compile_context>
chip_gen: v7x
topology: tpu7x:2x2x1
jax: 0.10.0
libtpu: 0.0.40
codegen_flags: <defaults>
</compile_context>

<pallas_src>
import functools

import jax
import jax.numpy as jnp
from jax.experimental import pallas as pl
from jax.experimental.pallas import tpu as pltpu

_VMEM_LIMIT = 40 * 1024 * 1024          # explicit scoped-VMEM budget (portable v5e/v6e/v7x)
_H_RESIDENT_BUDGET = 20 * 1024 * 1024   # 2x (double-buffer) h bytes must fit under this


def _round_up(x, m):
    return ((x + m - 1) // m) * m


def _pad2d(x, rows, cols):
    r, c = x.shape
    if r == rows and c == cols:
        return x
    return jnp.pad(x, ((0, rows - r), (0, cols - c)))


def _pick_tile(dim, candidates):
    for c in candidates:
        if c <= dim and dim % c == 0:
            return c
    return candidates[-1]


# --------------------------------------------------------------------------
# Plain tiled matmul + bias (used for the initial Linear).
# --------------------------------------------------------------------------
def _matmul_bias_kernel(x_ref, w_ref, b_ref, o_ref, acc_ref, *, apply_relu):
    k = pl.program_id(2)

    @pl.when(k == 0)
    def _():
        acc_ref[...] = jnp.zeros_like(acc_ref)

    acc_ref[...] += jnp.dot(
        x_ref[...], w_ref[...], preferred_element_type=jnp.float32
    )

    @pl.when(k == pl.num_programs(2) - 1)
    def _():
        y = acc_ref[...] + b_ref[...]
        if apply_relu:
            y = jnp.maximum(y, 0.0)
        o_ref[...] = y.astype(o_ref.dtype)


def linear_pallas(x, w, b, Mp, Np_out, *, out_dtype, apply_relu=False):
    """y = x @ w + b, returned already padded to (Mp, Np_out) in out_dtype."""
    _, K = x.shape
    Kp = _round_up(K, 128)
    xp = _pad2d(x.astype(jnp.float32), Mp, Kp)
    wp = _pad2d(w.astype(jnp.float32), Kp, Np_out)
    if b is None:
        bp = jnp.zeros((1, Np_out), jnp.float32)
    else:
        bp = _pad2d(b.reshape(1, -1).astype(jnp.float32), 1, Np_out)

    tm = _pick_tile(Mp, (256, 128))
    tn = _pick_tile(Np_out, (256, 128))
    tk = _pick_tile(Kp, (512, 256, 128))
    grid = (Mp // tm, Np_out // tn, Kp // tk)

    kernel = functools.partial(_matmul_bias_kernel, apply_relu=apply_relu)
    return pl.pallas_call(
        kernel,
        out_shape=jax.ShapeDtypeStruct((Mp, Np_out), out_dtype),
        grid_spec=pltpu.PrefetchScalarGridSpec(
            num_scalar_prefetch=0,
            grid=grid,
            in_specs=[
                pl.BlockSpec((tm, tk), lambda i, j, k: (i, k)),
                pl.BlockSpec((tk, tn), lambda i, j, k: (k, j)),
                pl.BlockSpec((1, tn), lambda i, j, k: (0, j)),
            ],
            out_specs=pl.BlockSpec((tm, tn), lambda i, j, k: (i, j)),
            scratch_shapes=[pltpu.VMEM((tm, tn), jnp.float32)],
        ),
        compiler_params=pltpu.CompilerParams(
            dimension_semantics=("parallel", "parallel", "arbitrary"),
            vmem_limit_bytes=_VMEM_LIMIT,
        ),
    )(xp, wp, bp)


# --------------------------------------------------------------------------
# Fused GraphConv step:  out = (A_hat @ h) @ W + b   in one pallas_call.
#   - A_hat tiles stream in bf16, accumulate into f32 VMEM scratch over k.
#   - h is either fully VMEM-resident (sliced along k in-kernel) or k-tiled.
#   - W (f32) and b (f32) are VMEM-resident; the epilogue matmul + bias (and
#     optional ReLU) runs once at k == last.
# --------------------------------------------------------------------------
def _graphconv_kernel(a_ref, h_ref, w_ref, b_ref, o_ref, acc_ref, *,
                      tk, h_resident, apply_relu):
    k = pl.program_id(1)

    @pl.when(k == 0)
    def _():
        acc_ref[...] = jnp.zeros_like(acc_ref)

    if h_resident:
        start = pl.multiple_of(k * tk, tk)
        h_blk = h_ref[pl.ds(start, tk), :]
    else:
        h_blk = h_ref[...]

    acc_ref[...] += jnp.dot(
        a_ref[...], h_blk, preferred_element_type=jnp.float32
    )

    @pl.when(k == pl.num_programs(1) - 1)
    def _():
        y = jnp.dot(acc_ref[...], w_ref[...], preferred_element_type=jnp.float32)
        y = y + b_ref[...]
        if apply_relu:
            y = jnp.maximum(y, 0.0)
        o_ref[...] = y.astype(o_ref.dtype)


def graphconv_pallas(a_hat_p, h_p, w_p, b_p, *, tm, tk, out_dtype,
                     apply_relu=False):
    Np = a_hat_p.shape[0]
    Fp = h_p.shape[1]

    h_bytes = h_p.size * h_p.dtype.itemsize
    h_resident = (2 * h_bytes) <= _H_RESIDENT_BUDGET
    if h_resident:
        h_spec = pl.BlockSpec((Np, Fp), lambda i, k: (0, 0))
    else:
        h_spec = pl.BlockSpec((tk, Fp), lambda i, k: (k, 0))

    kernel = functools.partial(
        _graphconv_kernel, tk=tk, h_resident=h_resident, apply_relu=apply_relu
    )
    return pl.pallas_call(
        kernel,
        out_shape=jax.ShapeDtypeStruct((Np, Fp), out_dtype),
        grid_spec=pltpu.PrefetchScalarGridSpec(
            num_scalar_prefetch=0,
            grid=(Np // tm, Np // tk),
            in_specs=[
                pl.BlockSpec((tm, tk), lambda i, k: (i, k)),   # a_hat (bf16)
                h_spec,                                        # h     (bf16)
                pl.BlockSpec((Fp, Fp), lambda i, k: (0, 0)),   # W     (f32, resident)
                pl.BlockSpec((1, Fp), lambda i, k: (0, 0)),    # b     (f32, resident)
            ],
            out_specs=pl.BlockSpec((tm, Fp), lambda i, k: (i, 0)),
            scratch_shapes=[pltpu.VMEM((tm, Fp), jnp.float32)],
        ),
        compiler_params=pltpu.CompilerParams(
            dimension_semantics=("parallel", "arbitrary"),
            vmem_limit_bytes=_VMEM_LIMIT,
        ),
    )(a_hat_p, h_p, w_p, b_p)


# --------------------------------------------------------------------------
# Full forward.
# --------------------------------------------------------------------------
def gcn_v1_forward(a_hat, in_feat, params, *, prop_step=2, relu=False, res=False):
    """Pallas equivalent of GCN_v1.forward (default config).

    a_hat:   (N, N) dense symmetric-normalized adjacency D^-1/2 A D^-1/2
    in_feat: (N, in_feats) node features
    params:  dict with w_lin (in_feats, h_feats) or None, b_lin (h_feats,),
             w_gcn (h_feats, h_feats), b_gcn (h_feats,)
    """
    # TODO(synk): norm=True path (LayerNorm + Dropout) not implemented — module
    #             default is norm=False, so only the optional ReLU is applied.
    # TODO(synk): SAGE/GAT/GIN conv variants and multilayer=True not translated
    #             (module default conv='GCN', multilayer=False).
    # TODO(synk): edge_weight (e_feat) not supported in this dense form.
    # TODO(synk): for very small graphs the whole forward (lin + both prop
    #             steps) could be fused into a single VMEM-resident
    #             pallas_call; not done here to keep the kernel general.
    w_lin, b_lin = params["w_lin"], params["b_lin"]
    w_gcn, b_gcn = params["w_gcn"], params["b_gcn"]

    N = a_hat.shape[0]
    F = w_gcn.shape[0]

    # ---- padded sizes & tile plan (computed once, reused every step) -------
    Np = _round_up(N, 128)
    if Np > 512:
        Np = _round_up(N, 512)
    Fp = _round_up(F, 128)

    tm = _pick_tile(Np, (512, 256, 128))
    tk = _pick_tile(Np, (1024, 512, 256, 128))
    # Keep the (tm, Fp) accumulator / output tiles modest for very wide F.
    while tm > 128 and tm * Fp * 4 > 2 * 1024 * 1024:
        tm //= 2
    # Ensure >=2 programs on the parallel row axis when possible (v7x 2 TCs).
    while (Np // tm) < 2 and tm > 128:
        tm //= 2

    # ---- pad once, cast the streamed operands to bf16 once -----------------
    a_hat_p = _pad2d(a_hat.astype(jnp.float32), Np, Np).astype(jnp.bfloat16)
    w_gcn_p = _pad2d(w_gcn.astype(jnp.float32), Fp, Fp)
    b_gcn_p = _pad2d(b_gcn.reshape(1, -1).astype(jnp.float32), 1, Fp)

    # ---- self.lin: Linear if in_feats != h_feats else Identity --------------
    if w_lin is not None:
        h = linear_pallas(in_feat, w_lin, b_lin, Np, Fp,
                          out_dtype=jnp.bfloat16, apply_relu=relu)
    else:
        h = _pad2d(in_feat.astype(jnp.float32), Np, Fp)
        if relu:
            h = jnp.maximum(h, 0.0)
        h = h.astype(jnp.bfloat16)
    ori = h

    # ---- prop_step fused GraphConv steps ------------------------------------
    for i in range(prop_step):
        if i != 0:
            # TODO(synk): res/relu between steps could be folded into the
            # previous step's epilogue; default config has both disabled.
            if res:
                h = (h.astype(jnp.float32) + ori.astype(jnp.float32))
            if relu:
                h = jnp.maximum(h, 0.0)
            h = h.astype(jnp.bfloat16)
        last = (i == prop_step - 1)
        h = graphconv_pallas(
            a_hat_p, h, w_gcn_p, b_gcn_p,
            tm=tm, tk=tk,
            out_dtype=jnp.float32 if last else jnp.bfloat16,
        )

    return h[:N, :F].astype(jnp.float32)


if __name__ == "__main__":
    key = jax.random.PRNGKey(0)
    k_x, k_wl, k_bl, k_wg, k_bg = jax.random.split(key, 5)

    num_nodes, in_feats, h_feats, prop_step = 256, 64, 128, 2

    # Deterministic small graph: undirected ring + self-loops.
    idx = jnp.arange(num_nodes)
    A = jnp.zeros((num_nodes, num_nodes), jnp.float32)
    A = A.at[idx, (idx + 1) % num_nodes].set(1.0)
    A = A.at[(idx + 1) % num_nodes, idx].set(1.0)
    A = A.at[idx, idx].set(1.0)
    deg = jnp.sum(A, axis=1)
    d_inv_sqrt = 1.0 / jnp.sqrt(jnp.maximum(deg, 1.0))
    a_hat = d_inv_sqrt[:, None] * A * d_inv_sqrt[None, :]

    x = jax.random.normal(k_x, (num_nodes, in_feats), jnp.float32)
    params = {
        "w_lin": jax.random.normal(k_wl, (in_feats, h_feats), jnp.float32)
        / jnp.sqrt(float(in_feats)),
        "b_lin": 0.1 * jax.random.normal(k_bl, (h_feats,), jnp.float32),
        "w_gcn": jax.random.normal(k_wg, (h_feats, h_feats), jnp.float32)
        / jnp.sqrt(float(h_feats)),
        "b_gcn": 0.1 * jax.random.normal(k_bg, (h_feats,), jnp.float32),
    }

    fwd = jax.jit(functools.partial(gcn_v1_forward, prop_step=prop_step))
    out = fwd(a_hat, x, params)
    out = jax.block_until_ready(out)

    # Plain-JAX f32 reference of the same forward.
    h_ref = x @ params["w_lin"] + params["b_lin"]
    for _ in range(prop_step):
        h_ref = (a_hat @ h_ref) @ params["w_gcn"] + params["b_gcn"]

    assert out.shape == h_ref.shape == (num_nodes, h_feats)
    max_err = float(jnp.max(jnp.abs(out - h_ref)))
    assert jnp.allclose(out, h_ref, atol=5e-2, rtol=5e-2), max_err

    print("KERNEL_OK")
</pallas_src>

<mosaic_0001>
module attributes {stable_mosaic.version = 11 : i64} {
  func.func @_matmul_bias_kernel(%arg0: i32, %arg1: i32, %arg2: i32, %arg3: memref<256x128xf32, #tpu.memory_space<vmem>>, %arg4: memref<128x128xf32, #tpu.memory_space<vmem>>, %arg5: memref<1x128xf32, #tpu.memory_space<vmem>>, %arg6: memref<256x128xbf16, #tpu.memory_space<vmem>>, %arg7: memref<256x128xf32, #tpu.memory_space<vmem>>) attributes {dimension_semantics = [#tpu.dimension_semantics<parallel>, #tpu.dimension_semantics<parallel>, #tpu.dimension_semantics<arbitrary>], iteration_bounds = array<i64: 1, 1, 1>, scalar_prefetch = 0 : i64, scratch_operands = 1 : i64, tpu.core_type = #tpu.core_type<tc>, window_params = [{transform_indices = @transform_0, window_bounds = array<i64: 256, 128>}, {transform_indices = @transform_1, window_bounds = array<i64: 128, 128>}, {transform_indices = @transform_2, window_bounds = array<i64: 1, 128>}, {transform_indices = @transform_3, window_bounds = array<i64: 256, 128>}]} {
    %c0_i32 = arith.constant 0 : i32
    %0 = arith.cmpi eq, %arg2, %c0_i32 : i32
    %1 = arith.extui %0 : i1 to i32
    %c0_i32_0 = arith.constant 0 : i32
    %2 = arith.cmpi ne, %1, %c0_i32_0 : i32
    scf.if %2 {
      %cst_10 = arith.constant 0.000000e+00 : f32
      %12 = vector.broadcast %cst_10 : f32 to vector<256x128xf32>
      %c0_11 = arith.constant 0 : index
      %c0_12 = arith.constant 0 : index
      %13 = vector.load %arg7[%c0_11, %c0_12] : memref<256x128xf32, #tpu.memory_space<vmem>>, vector<256x128xf32>
      tpu.vector_store %arg7[%c0_11, %c0_12], %12 {strides = array<i32>} : memref<256x128xf32, #tpu.memory_space<vmem>>, vector<256x128xf32>,
    } else {
    }
    %c0 = arith.constant 0 : index
    %c0_1 = arith.constant 0 : index
    %3 = vector.load %arg7[%c0, %c0_1] : memref<256x128xf32, #tpu.memory_space<vmem>>, vector<256x128xf32>
    %c0_2 = arith.constant 0 : index
    %c0_3 = arith.constant 0 : index
    %4 = vector.load %arg3[%c0_2, %c0_3] : memref<256x128xf32, #tpu.memory_space<vmem>>, vector<256x128xf32>
    %c0_4 = arith.constant 0 : index
    %c0_5 = arith.constant 0 : index
    %5 = vector.load %arg4[%c0_4, %c0_5] : memref<128x128xf32, #tpu.memory_space<vmem>>, vector<128x128xf32>
    %cst = arith.constant dense<0.000000e+00> : vector<256x128xf32>
    %6 = tpu.matmul %4, %5, %cst {dimension_numbers = #tpu.dot_dimension_numbers<[1], [0], [0], [1], [0, 0, 1, 1], [], []>} : vector<256x128xf32>, vector<128x128xf32>, vector<256x128xf32> -> vector<256x128xf32>
    %7 = arith.addf %3, %6 : vector<256x128xf32>
    %c0_6 = arith.constant 0 : index
    %c0_7 = arith.constant 0 : index
    %8 = vector.load %arg7[%c0_6, %c0_7] : memref<256x128xf32, #tpu.memory_space<vmem>>, vector<256x128xf32>
    tpu.vector_store %arg7[%c0_6, %c0_7], %7 {strides = array<i32>} : memref<256x128xf32, #tpu.memory_space<vmem>>, vector<256x128xf32>,
    %c0_i32_8 = arith.constant 0 : i32
    %9 = arith.cmpi eq, %arg2, %c0_i32_8 : i32
    %10 = arith.extui %9 : i1 to i32
    %c0_i32_9 = arith.constant 0 : i32
    %11 = arith.cmpi ne, %10, %c0_i32_9 : i32
    scf.if %11 {
      %c0_10 = arith.constant 0 : index
      %c0_11 = arith.constant 0 : index
      %12 = vector.load %arg7[%c0_10, %c0_11] : memref<256x128xf32, #tpu.memory_space<vmem>>, vector<256x128xf32>
      %c0_12 = arith.constant 0 : index
      %c0_13 = arith.constant 0 : index
      %13 = vector.load %arg5[%c0_12, %c0_13] : memref<1x128xf32, #tpu.memory_space<vmem>>, vector<1x128xf32>
      %14 = vector.broadcast %13 : vector<1x128xf32> to vector<256x128xf32>
      %15 = arith.addf %12, %14 : vector<256x128xf32>
      %16 = arith.truncf %15 : vector<256x128xf32> to vector<256x128xbf16>
      %c0_14 = arith.constant 0 : index
      %c0_15 = arith.constant 0 : index
      %17 = vector.load %arg6[%c0_14, %c0_15] : memref<256x128xbf16, #tpu.memory_space<vmem>>, vector<256x128xbf16>
      tpu.vector_store %arg6[%c0_14, %c0_15], %16 {strides = array<i32>} : memref<256x128xbf16, #tpu.memory_space<vmem>>, vector<256x128xbf16>,
    } else {
    }
    return
  }
  func.func @transform_0(%arg0: i32, %arg1: i32, %arg2: i32) -> (i32, i32) {
    %c0_i32 = arith.constant 0 : i32
    return %arg0, %arg2 : i32, i32
  }
  func.func @transform_1(%arg0: i32, %arg1: i32, %arg2: i32) -> (i32, i32) {
    %c0_i32 = arith.constant 0 : i32
    return %arg2, %arg1 : i32, i32
  }
  func.func @transform_2(%arg0: i32, %arg1: i32, %arg2: i32) -> (i32, i32) {
    %c0_i32 = arith.constant 0 : i32
    %c0_i32_0 = arith.constant 0 : i32
    return %c0_i32, %arg1 : i32, i32
  }
  func.func @transform_3(%arg0: i32, %arg1: i32, %arg2: i32) -> (i32, i32) {
    %c0_i32 = arith.constant 0 : i32
    return %arg0, %arg1 : i32, i32
  }
}

module attributes {stable_mosaic.version = 11 : i64} {
  func.func @_graphconv_kernel(%arg0: i32, %arg1: i32, %arg2: memref<128x256xbf16, #tpu.memory_space<vmem>>, %arg3: memref<256x128xbf16, #tpu.memory_space<vmem>>, %arg4: memref<128x128xf32, #tpu.memory_space<vmem>>, %arg5: memref<1x128xf32, #tpu.memory_space<vmem>>, %arg6: memref<128x128xf32, #tpu.memory_space<vmem>>, %arg7: memref<128x128xf32, #tpu.memory_space<vmem>>) attributes {dimension_semantics = [#tpu.dimension_semantics<parallel>, #tpu.dimension_semantics<arbitrary>], iteration_bounds = array<i64: 2, 1>, scalar_prefetch = 0 : i64, scratch_operands = 1 : i64, tpu.core_type = #tpu.core_type<tc>, window_params = [{transform_indices = @transform_0, window_bounds = array<i64: 128, 256>}, {pipeline_mode = #tpu.pipeline_mode<synchronous>, transform_indices = @transform_1, window_bounds = array<i64: 256, 128>}, {pipeline_mode = #tpu.pipeline_mode<synchronous>, transform_indices = @transform_2, window_bounds = array<i64: 128, 128>}, {pipeline_mode = #tpu.pipeline_mode<synchronous>, transform_indices = @transform_3, window_bounds = array<i64: 1, 128>}, {transform_indices = @transform_4, window_bounds = array<i64: 128, 128>}]} {
    %c0_i32 = arith.constant 0 : i32
    %0 = arith.cmpi eq, %arg1, %c0_i32 : i32
    %1 = arith.extui %0 : i1 to i32
    %c0_i32_0 = arith.constant 0 : i32
    %2 = arith.cmpi ne, %1, %c0_i32_0 : i32
    scf.if %2 {
      %cst_9 = arith.constant 0.000000e+00 : f32
      %15 = vector.broadcast %cst_9 : f32 to vector<128x128xf32>
      %c0_10 = arith.constant 0 : index
      %c0_11 = arith.constant 0 : index
      %16 = vector.load %arg7[%c0_10, %c0_11] : memref<128x128xf32, #tpu.memory_space<vmem>>, vector<128x128xf32>
      tpu.vector_store %arg7[%c0_10, %c0_11], %15 {strides = array<i32>} : memref<128x128xf32, #tpu.memory_space<vmem>>, vector<128x128xf32>,
    } else {
    }
    %c256_i32 = arith.constant 256 : i32
    %3 = arith.muli %arg1, %c256_i32 : i32
    %4 = tpu.assume_multiple %3, 256 : i32
    %5 = arith.index_cast %4 : i32 to index
    %c0 = arith.constant 0 : index
    %6 = vector.load %arg3[%5, %c0] : memref<256x128xbf16, #tpu.memory_space<vmem>>, vector<256x128xbf16>
    %c0_1 = arith.constant 0 : index
    %c0_2 = arith.constant 0 : index
    %7 = vector.load %arg7[%c0_1, %c0_2] : memref<128x128xf32, #tpu.memory_space<vmem>>, vector<128x128xf32>
    %c0_3 = arith.constant 0 : index
    %c0_4 = arith.constant 0 : index
    %8 = vector.load %arg2[%c0_3, %c0_4] : memref<128x256xbf16, #tpu.memory_space<vmem>>, vector<128x256xbf16>
    %cst = arith.constant dense<0.000000e+00> : vector<128x128xf32>
    %9 = tpu.matmul %8, %6, %cst {dimension_numbers = #tpu.dot_dimension_numbers<[1], [0], [0], [1], [0, 0, 1, 1], [], []>} : vector<128x256xbf16>, vector<256x128xbf16>, vector<128x128xf32> -> vector<128x128xf32>
    %10 = arith.addf %7, %9 : vector<128x128xf32>
    %c0_5 = arith.constant 0 : index
    %c0_6 = arith.constant 0 : index
    %11 = vector.load %arg7[%c0_5, %c0_6] : memref<128x128xf32, #tpu.memory_space<vmem>>, vector<128x128xf32>
    tpu.vector_store %arg7[%c0_5, %c0_6], %10 {strides = array<i32>} : memref<128x128xf32, #tpu.memory_space<vmem>>, vector<128x128xf32>,
    %c0_i32_7 = arith.constant 0 : i32
    %12 = arith.cmpi eq, %arg1, %c0_i32_7 : i32
    %13 = arith.extui %12 : i1 to i32
    %c0_i32_8 = arith.constant 0 : i32
    %14 = arith.cmpi ne, %13, %c0_i32_8 : i32
    scf.if %14 {
      %c0_9 = arith.constant 0 : index
      %c0_10 = arith.constant 0 : index
      %15 = vector.load %arg7[%c0_9, %c0_10] : memref<128x128xf32, #tpu.memory_space<vmem>>, vector<128x128xf32>
      %c0_11 = arith.constant 0 : index
      %c0_12 = arith.constant 0 : index
      %16 = vector.load %arg4[%c0_11, %c0_12] : memref<128x128xf32, #tpu.memory_space<vmem>>, vector<128x128xf32>
      %cst_13 = arith.constant dense<0.000000e+00> : vector<128x128xf32>
      %17 = tpu.matmul %15, %16, %cst_13 {dimension_numbers = #tpu.dot_dimension_numbers<[1], [0], [0], [1], [0, 0, 1, 1], [], []>} : vector<128x128xf32>, vector<128x128xf32>, vector<128x128xf32> -> vector<128x128xf32>
      %c0_14 = arith.constant 0 : index
      %c0_15 = arith.constant 0 : index
      %18 = vector.load %arg5[%c0_14, %c0_15] : memref<1x128xf32, #tpu.memory_space<vmem>>, vector<1x128xf32>
      %19 = vector.broadcast %18 : vector<1x128xf32> to vector<128x128xf32>
      %20 = arith.addf %17, %19 : vector<128x128xf32>
      %c0_16 = arith.constant 0 : index
      %c0_17 = arith.constant 0 : index
      %21 = vector.load %arg6[%c0_16, %c0_17] : memref<128x128xf32, #tpu.memory_space<vmem>>, vector<128x128xf32>
      tpu.vector_store %arg6[%c0_16, %c0_17], %20 {strides = array<i32>} : memref<128x128xf32, #tpu.memory_space<vmem>>, vector<128x128xf32>,
    } else {
    }
    return
  }
  func.func @transform_0(%arg0: i32, %arg1: i32) -> (i32, i32) {
    %c0_i32 = arith.constant 0 : i32
    return %arg0, %arg1 : i32, i32
  }
  func.func @transform_1(%arg0: i32, %arg1: i32) -> (i32, i32) {
    %c0_i32 = arith.constant 0 : i32
    %c0_i32_0 = arith.constant 0 : i32
    %c0_i32_1 = arith.constant 0 : i32
    return %c0_i32, %c0_i32_0 : i32, i32
  }
  func.func @transform_2(%arg0: i32, %arg1: i32) -> (i32, i32) {
    %c0_i32 = arith.constant 0 : i32
    %c0_i32_0 = arith.constant 0 : i32
    %c0_i32_1 = arith.constant 0 : i32
    return %c0_i32, %c0_i32_0 : i32, i32
  }
  func.func @transform_3(%arg0: i32, %arg1: i32) -> (i32, i32) {
    %c0_i32 = arith.constant 0 : i32
    %c0_i32_0 = arith.constant 0 : i32
    %c0_i32_1 = arith.constant 0 : i32
    return %c0_i32, %c0_i32_0 : i32, i32
  }
  func.func @transform_4(%arg0: i32, %arg1: i32) -> (i32, i32) {
    %c0_i32 = arith.constant 0 : i32
    %c0_i32_0 = arith.constant 0 : i32
    return %arg0, %c0_i32 : i32, i32
  }
}

module attributes {stable_mosaic.version = 11 : i64} {
  func.func @_graphconv_kernel(%arg0: i32, %arg1: i32, %arg2: memref<128x256xbf16, #tpu.memory_space<vmem>>, %arg3: memref<256x128xbf16, #tpu.memory_space<vmem>>, %arg4: memref<128x128xf32, #tpu.memory_space<vmem>>, %arg5: memref<1x128xf32, #tpu.memory_space<vmem>>, %arg6: memref<128x128xbf16, #tpu.memory_space<vmem>>, %arg7: memref<128x128xf32, #tpu.memory_space<vmem>>) attributes {dimension_semantics = [#tpu.dimension_semantics<parallel>, #tpu.dimension_semantics<arbitrary>], iteration_bounds = array<i64: 2, 1>, scalar_prefetch = 0 : i64, scratch_operands = 1 : i64, tpu.core_type = #tpu.core_type<tc>, window_params = [{transform_indices = @transform_0, window_bounds = array<i64: 128, 256>}, {pipeline_mode = #tpu.pipeline_mode<synchronous>, transform_indices = @transform_1, window_bounds = array<i64: 256, 128>}, {pipeline_mode = #tpu.pipeline_mode<synchronous>, transform_indices = @transform_2, window_bounds = array<i64: 128, 128>}, {pipeline_mode = #tpu.pipeline_mode<synchronous>, transform_indices = @transform_3, window_bounds = array<i64: 1, 128>}, {transform_indices = @transform_4, window_bounds = array<i64: 128, 128>}]} {
    %c0_i32 = arith.constant 0 : i32
    %0 = arith.cmpi eq, %arg1, %c0_i32 : i32
    %1 = arith.extui %0 : i1 to i32
    %c0_i32_0 = arith.constant 0 : i32
    %2 = arith.cmpi ne, %1, %c0_i32_0 : i32
    scf.if %2 {
      %cst_9 = arith.constant 0.000000e+00 : f32
      %15 = vector.broadcast %cst_9 : f32 to vector<128x128xf32>
      %c0_10 = arith.constant 0 : index
      %c0_11 = arith.constant 0 : index
      %16 = vector.load %arg7[%c0_10, %c0_11] : memref<128x128xf32, #tpu.memory_space<vmem>>, vector<128x128xf32>
      tpu.vector_store %arg7[%c0_10, %c0_11], %15 {strides = array<i32>} : memref<128x128xf32, #tpu.memory_space<vmem>>, vector<128x128xf32>,
    } else {
    }
    %c256_i32 = arith.constant 256 : i32
    %3 = arith.muli %arg1, %c256_i32 : i32
    %4 = tpu.assume_multiple %3, 256 : i32
    %5 = arith.index_cast %4 : i32 to index
    %c0 = arith.constant 0 : index
    %6 = vector.load %arg3[%5, %c0] : memref<256x128xbf16, #tpu.memory_space<vmem>>, vector<256x128xbf16>
    %c0_1 = arith.constant 0 : index
    %c0_2 = arith.constant 0 : index
    %7 = vector.load %arg7[%c0_1, %c0_2] : memref<128x128xf32, #tpu.memory_space<vmem>>, vector<128x128xf32>
    %c0_3 = arith.constant 0 : index
    %c0_4 = arith.constant 0 : index
    %8 = vector.load %arg2[%c0_3, %c0_4] : memref<128x256xbf16, #tpu.memory_space<vmem>>, vector<128x256xbf16>
    %cst = arith.constant dense<0.000000e+00> : vector<128x128xf32>
    %9 = tpu.matmul %8, %6, %cst {dimension_numbers = #tpu.dot_dimension_numbers<[1], [0], [0], [1], [0, 0, 1, 1], [], []>} : vector<128x256xbf16>, vector<256x128xbf16>, vector<128x128xf32> -> vector<128x128xf32>
    %10 = arith.addf %7, %9 : vector<128x128xf32>
    %c0_5 = arith.constant 0 : index
    %c0_6 = arith.constant 0 : index
    %11 = vector.load %arg7[%c0_5, %c0_6] : memref<128x128xf32, #tpu.memory_space<vmem>>, vector<128x128xf32>
    tpu.vector_store %arg7[%c0_5, %c0_6], %10 {strides = array<i32>} : memref<128x128xf32, #tpu.memory_space<vmem>>, vector<128x128xf32>,
    %c0_i32_7 = arith.constant 0 : i32
    %12 = arith.cmpi eq, %arg1, %c0_i32_7 : i32
    %13 = arith.extui %12 : i1 to i32
    %c0_i32_8 = arith.constant 0 : i32
    %14 = arith.cmpi ne, %13, %c0_i32_8 : i32
    scf.if %14 {
      %c0_9 = arith.constant 0 : index
      %c0_10 = arith.constant 0 : index
      %15 = vector.load %arg7[%c0_9, %c0_10] : memref<128x128xf32, #tpu.memory_space<vmem>>, vector<128x128xf32>
      %c0_11 = arith.constant 0 : index
      %c0_12 = arith.constant 0 : index
      %16 = vector.load %arg4[%c0_11, %c0_12] : memref<128x128xf32, #tpu.memory_space<vmem>>, vector<128x128xf32>
      %cst_13 = arith.constant dense<0.000000e+00> : vector<128x128xf32>
      %17 = tpu.matmul %15, %16, %cst_13 {dimension_numbers = #tpu.dot_dimension_numbers<[1], [0], [0], [1], [0, 0, 1, 1], [], []>} : vector<128x128xf32>, vector<128x128xf32>, vector<128x128xf32> -> vector<128x128xf32>
      %c0_14 = arith.constant 0 : index
      %c0_15 = arith.constant 0 : index
      %18 = vector.load %arg5[%c0_14, %c0_15] : memref<1x128xf32, #tpu.memory_space<vmem>>, vector<1x128xf32>
      %19 = vector.broadcast %18 : vector<1x128xf32> to vector<128x128xf32>
      %20 = arith.addf %17, %19 : vector<128x128xf32>
      %21 = arith.truncf %20 : vector<128x128xf32> to vector<128x128xbf16>
      %c0_16 = arith.constant 0 : index
      %c0_17 = arith.constant 0 : index
      %22 = vector.load %arg6[%c0_16, %c0_17] : memref<128x128xbf16, #tpu.memory_space<vmem>>, vector<128x128xbf16>
      tpu.vector_store %arg6[%c0_16, %c0_17], %21 {strides = array<i32>} : memref<128x128xbf16, #tpu.memory_space<vmem>>, vector<128x128xbf16>,
    } else {
    }
    return
  }
  func.func @transform_0(%arg0: i32, %arg1: i32) -> (i32, i32) {
    %c0_i32 = arith.constant 0 : i32
    return %arg0, %arg1 : i32, i32
  }
  func.func @transform_1(%arg0: i32, %arg1: i32) -> (i32, i32) {
    %c0_i32 = arith.constant 0 : i32
    %c0_i32_0 = arith.constant 0 : i32
    %c0_i32_1 = arith.constant 0 : i32
    return %c0_i32, %c0_i32_0 : i32, i32
  }
  func.func @transform_2(%arg0: i32, %arg1: i32) -> (i32, i32) {
    %c0_i32 = arith.constant 0 : i32
    %c0_i32_0 = arith.constant 0 : i32
    %c0_i32_1 = arith.constant 0 : i32
    return %c0_i32, %c0_i32_0 : i32, i32
  }
  func.func @transform_3(%arg0: i32, %arg1: i32) -> (i32, i32) {
    %c0_i32 = arith.constant 0 : i32
    %c0_i32_0 = arith.constant 0 : i32
    %c0_i32_1 = arith.constant 0 : i32
    return %c0_i32, %c0_i32_0 : i32, i32
  }
  func.func @transform_4(%arg0: i32, %arg1: i32) -> (i32, i32) {
    %c0_i32 = arith.constant 0 : i32
    %c0_i32_0 = arith.constant 0 : i32
    return %arg0, %c0_i32 : i32, i32
  }
}

</mosaic_0001>

<llo_original>
// kernel: gcn_v1_forward.3
$region0: #{gcn_v1_forward.3}
  #allocation0 [shape = 'u32[]', space=smem, size = 0x4, offset = 0x4, fixed_abs, tag = 'smem constant byte address 0x4 - core index']
  #allocation1 [shape = 'u32[144,128]{1,0:T(1,128)}', space=vmem, size = 0x12000, scoped, tag = 'internal scratch']
  #allocation2 [shape = 'f32[256,128]{1,0:T(8,128)}', space=vmem, size = 0x20000, scoped, tag = 'scratch operand']
  %s0 = inlined_call_operand.vmem [shape: f32[256,128], index: 0, kind: input, shape index: {}]
  %s1 = inlined_call_operand.vmem [shape: f32[128,128], index: 1, kind: input, shape index: {}]
  %s2 = inlined_call_operand.vmem [shape: f32[1,128], index: 2, kind: input, shape index: {}]
  %s3 = inlined_call_operand.vmem [shape: bf16[256,128], index: 3, kind: output, shape index: {}]
  %s4 = sld [smem:[#allocation0]]
  $region30: #{gcn_v1_forward.3} parent=0
    _
  %s6 = ssub.s32 1, %s4
  %s7 = scalar_select 0, %s6, %s4
  // Predicated region
  $region2: #{gcn_v1_forward.3} parent=0 // pred_check
    _
  $region3: #{gcn_v1_forward.3} parent=0 // pred_check_branch
    %9 = sbr.rel (0) target = $region5
  $region4: #{gcn_v1_forward.3} parent=0 // pred_region
    _
  $region5: #{gcn_v1_forward.3} parent=0 // pred_fallthru
    _
  // Predicated region
  $region6: #{gcn_v1_forward.3} parent=0 // pred_check
    _
  $region7: #{gcn_v1_forward.3} parent=0 // pred_check_branch
    %11 = sbr.rel (0) target = $region9
  $region8: #{gcn_v1_forward.3} parent=0 // pred_region
    _
  $region9: #{gcn_v1_forward.3} parent=0 // pred_fallthru
    _
  // Predicated region
  $region10: #{gcn_v1_forward.3} parent=0 // pred_check
    _
  $region11: #{gcn_v1_forward.3} parent=0 // pred_check_branch
    %13 = sbr.rel (0) target = $region13
  $region12: #{gcn_v1_forward.3} parent=0 // pred_region
    _
  $region13: #{gcn_v1_forward.3} parent=0 // pred_fallthru
    _
  %p14 = scmp.eq.s32.totalorder 0, 0
  // Predicated region
  $region14: #{gcn_v1_forward.3} parent=0 // pred_check
    %p15 = pneg %p14
  $region15: #{gcn_v1_forward.3} parent=0 // pred_check_branch
    %17 = sbr.rel (%p15) target = $region17
  $region16: #{gcn_v1_forward.3} parent=0 // pred_region
    %18 = vst [vmem:[#allocation2] sm:$0xff] 0.0
    %19 = vst [vmem:[#allocation2 + $0x8] sm:$0xff] 0.0
    %20 = vst [vmem:[#allocation2 + $0x10] sm:$0xff] 0.0
    %21 = vst [vmem:[#allocation2 + $0x18] sm:$0xff] 0.0
    %22 = vst [vmem:[#allocation2 + $0x20] sm:$0xff] 0.0
    %23 = vst [vmem:[#allocation2 + $0x28] sm:$0xff] 0.0
    %24 = vst [vmem:[#allocation2 + $0x30] sm:$0xff] 0.0
    %25 = vst [vmem:[#allocation2 + $0x38] sm:$0xff] 0.0
    %26 = vst [vmem:[#allocation2 + $0x40] sm:$0xff] 0.0
    %27 = vst [vmem:[#allocation2 + $0x48] sm:$0xff] 0.0
    %28 = vst [vmem:[#allocation2 + $0x50] sm:$0xff] 0.0
    %29 = vst [vmem:[#allocation2 + $0x58] sm:$0xff] 0.0
    %30 = vst [vmem:[#allocation2 + $0x60] sm:$0xff] 0.0
    %31 = vst [vmem:[#allocation2 + $0x68] sm:$0xff] 0.0
    %32 = vst [vmem:[#allocation2 + $0x70] sm:$0xff] 0.0
    %33 = vst [vmem:[#allocation2 + $0x78] sm:$0xff] 0.0
    %34 = vst [vmem:[#allocation2 + $0x80] sm:$0xff] 0.0
    %35 = vst [vmem:[#allocation2 + $0x88] sm:$0xff] 0.0
    %36 = vst [vmem:[#allocation2 + $0x90] sm:$0xff] 0.0
    %37 = vst [vmem:[#allocation2 + $0x98] sm:$0xff] 0.0
    %38 = vst [vmem:[#allocation2 + $0xa0] sm:$0xff] 0.0
    %39 = vst [vmem:[#allocation2 + $0xa8] sm:$0xff] 0.0
    %40 = vst [vmem:[#allocation2 + $0xb0] sm:$0xff] 0.0
    %41 = vst [vmem:[#allocation2 + $0xb8] sm:$0xff] 0.0
    %42 = vst [vmem:[#allocation2 + $0xc0] sm:$0xff] 0.0
    %43 = vst [vmem:[#allocation2 + $0xc8] sm:$0xff] 0.0
    %44 = vst [vmem:[#allocation2 + $0xd0] sm:$0xff] 0.0
    %45 = vst [vmem:[#allocation2 + $0xd8] sm:$0xff] 0.0
    %46 = vst [vmem:[#allocation2 + $0xe0] sm:$0xff] 0.0
    %47 = vst [vmem:[#allocation2 + $0xe8] sm:$0xff] 0.0
    %48 = vst [vmem:[#allocation2 + $0xf0] sm:$0xff] 0.0
    %49 = vst [vmem:[#allocation2 + $0xf8] sm:$0xff] 0.0
  $region17: #{gcn_v1_forward.3} parent=0 // pred_fallthru
    _
  %v50 = vld [vmem:[#allocation2] sm:$0xff]
  %v51 = vld [vmem:[#allocation2 + $0x8] sm:$0xff]
  %v52 = vld [vmem:[#allocation2 + $0x10] sm:$0xff]
  %v53 = vld [vmem:[#allocation2 + $0x18] sm:$0xff]
  %v54 = vld [vmem:[#allocation2 + $0x20] sm:$0xff]
  %v55 = vld [vmem:[#allocation2 + $0x28] sm:$0xff]
  %v56 = vld [vmem:[#allocation2 + $0x30] sm:$0xff]
  %v57 = vld [vmem:[#allocation2 + $0x38] sm:$0xff]
  %v58 = vld [vmem:[#allocation2 + $0x40] sm:$0xff]
  %v59 = vld [vmem:[#allocation2 + $0x48] sm:$0xff]
  %v60 = vld [vmem:[#allocation2 + $0x50] sm:$0xff]
  %v61 = vld [vmem:[#allocation2 + $0x58] sm:$0xff]
  %v62 = vld [vmem:[#allocation2 + $0x60] sm:$0xff]
  %v63 = vld [vmem:[#allocation2 + $0x68] sm:$0xff]
  %v64 = vld [vmem:[#allocation2 + $0x70] sm:$0xff]
  %v65 = vld [vmem:[#allocation2 + $0x78] sm:$0xff]
  %v66 = vld [vmem:[#allocation2 + $0x80] sm:$0xff]
  %v67 = vld [vmem:[#allocation2 + $0x88] sm:$0xff]
  %v68 = vld [vmem:[#allocation2 + $0x90] sm:$0xff]
  %v69 = vld [vmem:[#allocation2 + $0x98] sm:$0xff]
  %v70 = vld [vmem:[#allocation2 + $0xa0] sm:$0xff]
  %v71 = vld [vmem:[#allocation2 + $0xa8] sm:$0xff]
  %v72 = vld [vmem:[#allocation2 + $0xb0] sm:$0xff]
  %v73 = vld [vmem:[#allocation2 + $0xb8] sm:$0xff]
  %v74 = vld [vmem:[#allocation2 + $0xc0] sm:$0xff]
  %v75 = vld [vmem:[#allocation2 + $0xc8] sm:$0xff]
  %v76 = vld [vmem:[#allocation2 + $0xd0] sm:$0xff]
  %v77 = vld [vmem:[#allocation2 + $0xd8] sm:$0xff]
  %v78 = vld [vmem:[#allocation2 + $0xe0] sm:$0xff]
  %v79 = vld [vmem:[#allocation2 + $0xe8] sm:$0xff]
  %v80 = vld [vmem:[#allocation2 + $0xf0] sm:$0xff]
  %v81 = vld [vmem:[#allocation2 + $0xf8] sm:$0xff]
  %v82 = vld [vmem:[%s0] sm:$0xff]
  %v83 = vld [vmem:[%s0 + $0x8] sm:$0xff]
  %v84 = vld [vmem:[%s0 + $0x10] sm:$0xff]
  %v85 = vld [vmem:[%s0 + $0x18] sm:$0xff]
  %v86 = vld [vmem:[%s0 + $0x20] sm:$0xff]
  %v87 = vld [vmem:[%s0 + $0x28] sm:$0xff]
  %v88 = vld [vmem:[%s0 + $0x30] sm:$0xff]
  %v89 = vld [vmem:[%s0 + $0x38] sm:$0xff]
  %v90 = vld [vmem:[%s0 + $0x40] sm:$0xff]
  %v91 = vld [vmem:[%s0 + $0x48] sm:$0xff]
  %v92 = vld [vmem:[%s0 + $0x50] sm:$0xff]
  %v93 = vld [vmem:[%s0 + $0x58] sm:$0xff]
  %v94 = vld [vmem:[%s0 + $0x60] sm:$0xff]
  %v95 = vld [vmem:[%s0 + $0x68] sm:$0xff]
  %v96 = vld [vmem:[%s0 + $0x70] sm:$0xff]
  %v97 = vld [vmem:[%s0 + $0x78] sm:$0xff]
  %v98 = vld [vmem:[%s0 + $0x80] sm:$0xff]
  %v99 = vld [vmem:[%s0 + $0x88] sm:$0xff]
  %v100 = vld [vmem:[%s0 + $0x90] sm:$0xff]
  %v101 = vld [vmem:[%s0 + $0x98] sm:$0xff]
  %v102 = vld [vmem:[%s0 + $0xa0] sm:$0xff]
  %v103 = vld [vmem:[%s0 + $0xa8] sm:$0xff]
  %v104 = vld [vmem:[%s0 + $0xb0] sm:$0xff]
  %v105 = vld [vmem:[%s0 + $0xb8] sm:$0xff]
  %v106 = vld [vmem:[%s0 + $0xc0] sm:$0xff]
  %v107 = vld [vmem:[%s0 + $0xc8] sm:$0xff]
  %v108 = vld [vmem:[%s0 + $0xd0] sm:$0xff]
  %v109 = vld [vmem:[%s0 + $0xd8] sm:$0xff]
  %v110 = vld [vmem:[%s0 + $0xe0] sm:$0xff]
  %v111 = vld [vmem:[%s0 + $0xe8] sm:$0xff]
  %v112 = vld [vmem:[%s0 + $0xf0] sm:$0xff]
  %v113 = vld [vmem:[%s0 + $0xf8] sm:$0xff]
  %v114 = vld [vmem:[%s1] sm:$0xff]
  %v115 = vld [vmem:[%s1 + $0x8] sm:$0xff]
  %v116 = vld [vmem:[%s1 + $0x10] sm:$0xff]
  %v117 = vld [vmem:[%s1 + $0x18] sm:$0xff]
  %v118 = vld [vmem:[%s1 + $0x20] sm:$0xff]
  %v119 = vld [vmem:[%s1 + $0x28] sm:$0xff]
  %v120 = vld [vmem:[%s1 + $0x30] sm:$0xff]
  %v121 = vld [vmem:[%s1 + $0x38] sm:$0xff]
  %v122 = vld [vmem:[%s1 + $0x40] sm:$0xff]
  %v123 = vld [vmem:[%s1 + $0x48] sm:$0xff]
  %v124 = vld [vmem:[%s1 + $0x50] sm:$0xff]
  %v125 = vld [vmem:[%s1 + $0x58] sm:$0xff]
  %v126 = vld [vmem:[%s1 + $0x60] sm:$0xff]
  %v127 = vld [vmem:[%s1 + $0x68] sm:$0xff]
  %v128 = vld [vmem:[%s1 + $0x70] sm:$0xff]
  %v129 = vld [vmem:[%s1 + $0x78] sm:$0xff]
  %130 = vmatprep.subr.mxu0 0.0
  %131 = vmatpush1.msra.mxu0 %v114
  %132 = vmatprep.subr.mxu0 0.0
  %133 = vmatpush1.msra.mxu0 %v115
  %134 = vmatprep.subr.mxu0 0.0
  %135 = vmatpush1.msra.mxu0 %v116
  %136 = vmatprep.subr.mxu0 0.0
  %137 = vmatpush1.msra.mxu0 %v117
  %138 = vmatprep.subr.mxu0 0.0
  %139 = vmatpush1.msra.mxu0 %v118
  %140 = vmatprep.subr.mxu0 0.0
  %141 = vmatpush1.msra.mxu0 %v119
  %142 = vmatprep.subr.mxu0 0.0
  %143 = vmatpush1.msra.mxu0 %v120
  %144 = vmatprep.subr.mxu0 0.0
  %145 = vmatpush1.msra.mxu0 %v121
  %146 = vmatprep.subr.mxu0 0.0
  %147 = vmatpush1.msra.mxu0 %v122
  %148 = vmatprep.subr.mxu0 0.0
  %149 = vmatpush1.msra.mxu0 %v123
  %150 = vmatprep.subr.mxu0 0.0
  %151 = vmatpush1.msra.mxu0 %v124
  %152 = vmatprep.subr.mxu0 0.0
  %153 = vmatpush1.msra.mxu0 %v125
  %154 = vmatprep.subr.mxu0 0.0
  %155 = vmatpush1.msra.mxu0 %v126
  %156 = vmatprep.subr.mxu0 0.0
  %157 = vmatpush1.msra.mxu0 %v127
  %158 = vmatprep.subr.mxu0 0.0
  %159 = vmatpush1.msra.mxu0 %v128
  %160 = vmatprep.subr.mxu0 0.0
  %161 = vmatpush1.msra.mxu0 %v129
  %162 = vmatprep.subr.mxu0 0.0
  %163 = vmatpush1.msra.mxu0 0.0
  %164 = vmatprep.subr.mxu0 0.0
  %165 = vmatpush1.msra.mxu0 0.0
  %166 = vmatprep.subr.mxu0 0.0
  %167 = vmatpush1.msra.mxu0 0.0
  %168 = vmatprep.subr.mxu0 0.0
  %169 = vmatpush1.msra.mxu0 0.0
  %170 = vmatprep.subr.mxu0 0.0
  %171 = vmatpush1.msra.mxu0 0.0
  %172 = vmatprep.subr.mxu0 0.0
  %173 = vmatpush1.msra.mxu0 0.0
  %174 = vmatprep.subr.mxu0 0.0
  %175 = vmatpush1.msra.mxu0 0.0
  %176 = vmatprep.subr.mxu0 0.0
  %177 = vmatpush1.msra.mxu0 0.0
  %178 = vmatprep.subr.mxu0 0.0
  %179 = vmatpush1.msra.mxu0 0.0
  %180 = vmatprep.subr.mxu0 0.0
  %181 = vmatpush1.msra.mxu0 0.0
  %182 = vmatprep.subr.mxu0 0.0
  %183 = vmatpush1.msra.mxu0 0.0
  %184 = vmatprep.subr.mxu0 0.0
  %185 = vmatpush1.msra.mxu0 0.0
  %186 = vmatprep.subr.mxu0 0.0
  %187 = vmatpush1.msra.mxu0 0.0
  %188 = vmatprep.subr.mxu0 0.0
  %189 = vmatpush1.msra.mxu0 0.0
  %190 = vmatprep.subr.mxu0 0.0
  %191 = vmatpush1.msra.mxu0 0.0
  %192 = vmatprep.subr.mxu0 0.0
  %193 = vmatpush1.msra.mxu0 0.0
  %194 = vmatprep.mubr.f32.mxu0 0.0
  %195 = vmatmul.mubr.f32.gmra.mrb[0].mxu0 %v82
  %v196 = vpop.f32.mrb[0].mxu0
  %v197 = vadd.f32 0.0, %v196
  %v198 = vpop.f32.mrb[0].mxu0
  %199 = vmatprep.mubr.f32.mxu0 0.0
  %200 = vmatmul.mubr.f32.gmra.mrb[0].mxu0 %v83
  %v201 = vpop.f32.mrb[0].mxu0
  %v202 = vadd.f32 0.0, %v201
  %v203 = vpop.f32.mrb[0].mxu0
  %204 = vmatprep.mubr.f32.mxu0 0.0
  %205 = vmatmul.mubr.f32.gmra.mrb[0].mxu0 %v84
  %v206 = vpop.f32.mrb[0].mxu0
  %v207 = vadd.f32 0.0, %v206
  %v208 = vpop.f32.mrb[0].mxu0
  %209 = vmatprep.mubr.f32.mxu0 0.0
  %210 = vmatmul.mubr.f32.gmra.mrb[0].mxu0 %v85
  %v211 = vpop.f32.mrb[0].mxu0
  %v212 = vadd.f32 0.0, %v211
  %v213 = vpop.f32.mrb[0].mxu0
  %214 = vmatprep.mubr.f32.mxu0 0.0
  %215 = vmatmul.mubr.f32.gmra.mrb[0].mxu0 %v86
  %v216 = vpop.f32.mrb[0].mxu0
  %v217 = vadd.f32 0.0, %v216
  %v218 = vpop.f32.mrb[0].mxu0
  %219 = vmatprep.mubr.f32.mxu0 0.0
  %220 = vmatmul.mubr.f32.gmra.mrb[0].mxu0 %v87
  %v221 = vpop.f32.mrb[0].mxu0
  %v222 = vadd.f32 0.0, %v221
  %v223 = vpop.f32.mrb[0].mxu0
  %224 = vmatprep.mubr.f32.mxu0 0.0
  %225 = vmatmul.mubr.f32.gmra.mrb[0].mxu0 %v88
  %v226 = vpop.f32.mrb[0].mxu0
  %v227 = vadd.f32 0.0, %v226
  %v228 = vpop.f32.mrb[0].mxu0
  %229 = vmatprep.mubr.f32.mxu0 0.0
  %230 = vmatmul.mubr.f32.gmra.mrb[0].mxu0 %v89
  %v231 = vpop.f32.mrb[0].mxu0
  %v232 = vadd.f32 0.0, %v231
  %v233 = vpop.f32.mrb[0].mxu0
  %234 = vmatprep.mubr.f32.mxu0 0.0
  %235 = vmatmul.mubr.f32.gmra.mrb[0].mxu0 %v90
  %v236 = vpop.f32.mrb[0].mxu0
  %v237 = vadd.f32 0.0, %v236
  %v238 = vpop.f32.mrb[0].mxu0
  %239 = vmatprep.mubr.f32.mxu0 0.0
  %240 = vmatmul.mubr.f32.gmra.mrb[0].mxu0 %v91
  %v241 = vpop.f32.mrb[0].mxu0
  %v242 = vadd.f32 0.0, %v241
  %v243 = vpop.f32.mrb[0].mxu0
  %244 = vmatprep.mubr.f32.mxu0 0.0
  %245 = vmatmul.mubr.f32.gmra.mrb[0].mxu0 %v92
  %v246 = vpop.f32.mrb[0].mxu0
  %v247 = vadd.f32 0.0, %v246
  %v248 = vpop.f32.mrb[0].mxu0
  %249 = vmatprep.mubr.f32.mxu0 0.0
  %250 = vmatmul.mubr.f32.gmra.mrb[0].mxu0 %v93
  %v251 = vpop.f32.mrb[0].mxu0
  %v252 = vadd.f32 0.0, %v251
  %v253 = vpop.f32.mrb[0].mxu0
  %254 = vmatprep.mubr.f32.mxu0 0.0
  %255 = vmatmul.mubr.f32.gmra.mrb[0].mxu0 %v94
  %v256 = vpop.f32.mrb[0].mxu0
  %v257 = vadd.f32 0.0, %v256
  %v258 = vpop.f32.mrb[0].mxu0
  %259 = vmatprep.mubr.f32.mxu0 0.0
  %260 = vmatmul.mubr.f32.gmra.mrb[0].mxu0 %v95
  %v261 = vpop.f32.mrb[0].mxu0
  %v262 = vadd.f32 0.0, %v261
  %v263 = vpop.f32.mrb[0].mxu0
  %264 = vmatprep.mubr.f32.mxu0 0.0
  %265 = vmatmul.mubr.f32.gmra.mrb[0].mxu0 %v96
  %v266 = vpop.f32.mrb[0].mxu0
  %v267 = vadd.f32 0.0, %v266
  %v268 = vpop.f32.mrb[0].mxu0
  %269 = vmatprep.mubr.f32.mxu0 0.0
  %270 = vmatmul.mubr.f32.gmra.mrb[0].mxu0 %v97
  %v271 = vpop.f32.mrb[0].mxu0
  %v272 = vadd.f32 0.0, %v271
  %v273 = vpop.f32.mrb[0].mxu0
  %274 = vmatprep.mubr.f32.mxu0 0.0
  %275 = vmatmul.mubr.f32.gmra.mrb[0].mxu0 %v98
  %v276 = vpop.f32.mrb[0].mxu0
  %v277 = vadd.f32 0.0, %v276
  %v278 = vpop.f32.mrb[0].mxu0
  %279 = vmatprep.mubr.f32.mxu0 0.0
  %280 = vmatmul.mubr.f32.gmra.mrb[0].mxu0 %v99
  %v281 = vpop.f32.mrb[0].mxu0
  %v282 = vadd.f32 0.0, %v281
  %v283 = vpop.f32.mrb[0].mxu0
  %284 = vmatprep.mubr.f32.mxu0 0.0
  %285 = vmatmul.mubr.f32.gmra.mrb[0].mxu0 %v100
  %v286 = vpop.f32.mrb[0].mxu0
  %v287 = vadd.f32 0.0, %v286
  %v288 = vpop.f32.mrb[0].mxu0
  %289 = vmatprep.mubr.f32.mxu0 0.0
  %290 = vmatmul.mubr.f32.gmra.mrb[0].mxu0 %v101
  %v291 = vpop.f32.mrb[0].mxu0
  %v292 = vadd.f32 0.0, %v291
  %v293 = vpop.f32.mrb[0].mxu0
  %294 = vmatprep.mubr.f32.mxu0 0.0
  %295 = vmatmul.mubr.f32.gmra.mrb[0].mxu0 %v102
  %v296 = vpop.f32.mrb[0].mxu0
  %v297 = vadd.f32 0.0, %v296
  %v298 = vpop.f32.mrb[0].mxu0
  %299 = vmatprep.mubr.f32.mxu0 0.0
  %300 = vmatmul.mubr.f32.gmra.mrb[0].mxu0 %v103
  %v301 = vpop.f32.mrb[0].mxu0
  %v302 = vadd.f32 0.0, %v301
  %v303 = vpop.f32.mrb[0].mxu0
  %304 = vmatprep.mubr.f32.mxu0 0.0
  %305 = vmatmul.mubr.f32.gmra.mrb[0].mxu0 %v104
  %v306 = vpop.f32.mrb[0].mxu0
  %v307 = vadd.f32 0.0, %v306
  %v308 = vpop.f32.mrb[0].mxu0
  %309 = vmatprep.mubr.f32.mxu0 0.0
  %310 = vmatmul.mubr.f32.gmra.mrb[0].mxu0 %v105
  %v311 = vpop.f32.mrb[0].mxu0
  %v312 = vadd.f32 0.0, %v311
  %v313 = vpop.f32.mrb[0].mxu0
  %314 = vmatprep.mubr.f32.mxu0 0.0
  %315 = vmatmul.mubr.f32.gmra.mrb[0].mxu0 %v106
  %v316 = vpop.f32.mrb[0].mxu0
  %v317 = vadd.f32 0.0, %v316
  %v318 = vpop.f32.mrb[0].mxu0
  %319 = vmatprep.mubr.f32.mxu0 0.0
  %320 = vmatmul.mubr.f32.gmra.mrb[0].mxu0 %v107
  %v321 = vpop.f32.mrb[0].mxu0
  %v322 = vadd.f32 0.0, %v321
  %v323 = vpop.f32.mrb[0].mxu0
  %324 = vmatprep.mubr.f32.mxu0 0.0
  %325 = vmatmul.mubr.f32.gmra.mrb[0].mxu0 %v108
  %v326 = vpop.f32.mrb[0].mxu0
  %v327 = vadd.f32 0.0, %v326
  %v328 = vpop.f32.mrb[0].mxu0
  %329 = vmatprep.mubr.f32.mxu0 0.0
  %330 = vmatmul.mubr.f32.gmra.mrb[0].mxu0 %v109
  %v331 = vpop.f32.mrb[0].mxu0
  %v332 = vadd.f32 0.0, %v331
  %v333 = vpop.f32.mrb[0].mxu0
  %334 = vmatprep.mubr.f32.mxu0 0.0
  %335 = vmatmul.mubr.f32.gmra.mrb[0].mxu0 %v110
  %v336 = vpop.f32.mrb[0].mxu0
  %v337 = vadd.f32 0.0, %v336
  %v338 = vpop.f32.mrb[0].mxu0
  %339 = vmatprep.mubr.f32.mxu0 0.0
  %340 = vmatmul.mubr.f32.gmra.mrb[0].mxu0 %v111
  %v341 = vpop.f32.mrb[0].mxu0
  %v342 = vadd.f32 0.0, %v341
  %v343 = vpop.f32.mrb[0].mxu0
  %344 = vmatprep.mubr.f32.mxu0 0.0
  %345 = vmatmul.mubr.f32.gmra.mrb[0].mxu0 %v112
  %v346 = vpop.f32.mrb[0].mxu0
  %v347 = vadd.f32 0.0, %v346
  %v348 = vpop.f32.mrb[0].mxu0
  %349 = vmatprep.mubr.f32.mxu0 0.0
  %350 = vmatmul.mubr.f32.gmra.mrb[0].mxu0 %v113
  %v351 = vpop.f32.mrb[0].mxu0
  %v352 = vadd.f32 0.0, %v351
  %v353 = vpop.f32.mrb[0].mxu0
  %354 = vdwg.mxu0
  %v355 = vadd.f32 %v50, %v197
  %v356 = vadd.f32 %v51, %v202
  %v357 = vadd.f32 %v52, %v207
  %v358 = vadd.f32 %v53, %v212
  %v359 = vadd.f32 %v54, %v217
  %v360 = vadd.f32 %v55, %v222
  %v361 = vadd.f32 %v56, %v227
  %v362 = vadd.f32 %v57, %v232
  %v363 = vadd.f32 %v58, %v237
  %v364 = vadd.f32 %v59, %v242
  %v365 = vadd.f32 %v60, %v247
  %v366 = vadd.f32 %v61, %v252
  %v367 = vadd.f32 %v62, %v257
  %v368 = vadd.f32 %v63, %v262
  %v369 = vadd.f32 %v64, %v267
  %v370 = vadd.f32 %v65, %v272
  %v371 = vadd.f32 %v66, %v277
  %v372 = vadd.f32 %v67, %v282
  %v373 = vadd.f32 %v68, %v287
  %v374 = vadd.f32 %v69, %v292
  %v375 = vadd.f32 %v70, %v297
  %v376 = vadd.f32 %v71, %v302
  %v377 = vadd.f32 %v72, %v307
  %v378 = vadd.f32 %v73, %v312
  %v379 = vadd.f32 %v74, %v317
  %v380 = vadd.f32 %v75, %v322
  %v381 = vadd.f32 %v76, %v327
  %v382 = vadd.f32 %v77, %v332
  %v383 = vadd.f32 %v78, %v337
  %v384 = vadd.f32 %v79, %v342
  %v385 = vadd.f32 %v80, %v347
  %v386 = vadd.f32 %v81, %v352
  %387 = vst [vmem:[#allocation2] sm:$0xff] %v355
  %388 = vst [vmem:[#allocation2 + $0x8] sm:$0xff] %v356
  %389 = vst [vmem:[#allocation2 + $0x10] sm:$0xff] %v357
  %390 = vst [vmem:[#allocation2 + $0x18] sm:$0xff] %v358
  %391 = vst [vmem:[#allocation2 + $0x20] sm:$0xff] %v359
  %392 = vst [vmem:[#allocation2 + $0x28] sm:$0xff] %v360
  %393 = vst [vmem:[#allocation2 + $0x30] sm:$0xff] %v361
  %394 = vst [vmem:[#allocation2 + $0x38] sm:$0xff] %v362
  %395 = vst [vmem:[#allocation2 + $0x40] sm:$0xff] %v363
  %396 = vst [vmem:[#allocation2 + $0x48] sm:$0xff] %v364
  %397 = vst [vmem:[#allocation2 + $0x50] sm:$0xff] %v365
  %398 = vst [vmem:[#allocation2 + $0x58] sm:$0xff] %v366
  %399 = vst [vmem:[#allocation2 + $0x60] sm:$0xff] %v367
  %400 = vst [vmem:[#allocation2 + $0x68] sm:$0xff] %v368
  %401 = vst [vmem:[#allocation2 + $0x70] sm:$0xff] %v369
  %402 = vst [vmem:[#allocation2 + $0x78] sm:$0xff] %v370
  %403 = vst [vmem:[#allocation2 + $0x80] sm:$0xff] %v371
  %404 = vst [vmem:[#allocation2 + $0x88] sm:$0xff] %v372
  %405 = vst [vmem:[#allocation2 + $0x90] sm:$0xff] %v373
  %406 = vst [vmem:[#allocation2 + $0x98] sm:$0xff] %v374
  %407 = vst [vmem:[#allocation2 + $0xa0] sm:$0xff] %v375
  %408 = vst [vmem:[#allocation2 + $0xa8] sm:$0xff] %v376
  %409 = vst [vmem:[#allocation2 + $0xb0] sm:$0xff] %v377
  %410 = vst [vmem:[#allocation2 + $0xb8] sm:$0xff] %v378
  %411 = vst [vmem:[#allocation2 + $0xc0] sm:$0xff] %v379
  %412 = vst [vmem:[#allocation2 + $0xc8] sm:$0xff] %v380
  %413 = vst [vmem:[#allocation2 + $0xd0] sm:$0xff] %v381
  %414 = vst [vmem:[#allocation2 + $0xd8] sm:$0xff] %v382
  %415 = vst [vmem:[#allocation2 + $0xe0] sm:$0xff] %v383
  %416 = vst [vmem:[#allocation2 + $0xe8] sm:$0xff] %v384
  %417 = vst [vmem:[#allocation2 + $0xf0] sm:$0xff] %v385
  %418 = vst [vmem:[#allocation2 + $0xf8] sm:$0xff] %v386
  // Predicated region
  $region18: #{gcn_v1_forward.3} parent=0 // pred_check
    %p419 = pneg %p14
  $region19: #{gcn_v1_forward.3} parent=0 // pred_check_branch
    %421 = sbr.rel (%p419) target = $region21
  $region20: #{gcn_v1_forward.3} parent=0 // pred_region
    %v422 = vld [vmem:[#allocation2] sm:$0xff]
    %v423 = vld [vmem:[#allocation2 + $0x8] sm:$0xff]
    %v424 = vld [vmem:[#allocation2 + $0x10] sm:$0xff]
    %v425 = vld [vmem:[#allocation2 + $0x18] sm:$0xff]
    %v426 = vld [vmem:[#allocation2 + $0x20] sm:$0xff]
    %v427 = vld [vmem:[#allocation2 + $0x28] sm:$0xff]
    %v428 = vld [vmem:[#allocation2 + $0x30] sm:$0xff]
    %v429 = vld [vmem:[#allocation2 + $0x38] sm:$0xff]
    %v430 = vld [vmem:[#allocation2 + $0x40] sm:$0xff]
    %v431 = vld [vmem:[#allocation2 + $0x48] sm:$0xff]
    %v432 = vld [vmem:[#allocation2 + $0x50] sm:$0xff]
    %v433 = vld [vmem:[#allocation2 + $0x58] sm:$0xff]
    %v434 = vld [vmem:[#allocation2 + $0x60] sm:$0xff]
    %v435 = vld [vmem:[#allocation2 + $0x68] sm:$0xff]
    %v436 = vld [vmem:[#allocation2 + $0x70] sm:$0xff]
    %v437 = vld [vmem:[#allocation2 + $0x78] sm:$0xff]
    %v438 = vld [vmem:[#allocation2 + $0x80] sm:$0xff]
    %v439 = vld [vmem:[#allocation2 + $0x88] sm:$0xff]
    %v440 = vld [vmem:[#allocation2 + $0x90] sm:$0xff]
    %v441 = vld [vmem:[#allocation2 + $0x98] sm:$0xff]
    %v442 = vld [vmem:[#allocation2 + $0xa0] sm:$0xff]
    %v443 = vld [vmem:[#allocation2 + $0xa8] sm:$0xff]
    %v444 = vld [vmem:[#allocation2 + $0xb0] sm:$0xff]
    %v445 = vld [vmem:[#allocation2 + $0xb8] sm:$0xff]
    %v446 = vld [vmem:[#allocation2 + $0xc0] sm:$0xff]
    %v447 = vld [vmem:[#allocation2 + $0xc8] sm:$0xff]
    %v448 = vld [vmem:[#allocation2 + $0xd0] sm:$0xff]
    %v449 = vld [vmem:[#allocation2 + $0xd8] sm:$0xff]
    %v450 = vld [vmem:[#allocation2 + $0xe0] sm:$0xff]
    %v451 = vld [vmem:[#allocation2 + $0xe8] sm:$0xff]
    %v452 = vld [vmem:[#allocation2 + $0xf0] sm:$0xff]
    %v453 = vld [vmem:[#allocation2 + $0xf8] sm:$0xff]
    %v454 = vld [vmem:[%s2] sm:$0x1]
    %v456 = vlaneseq
    %v457 = vshrl.u32 %v456, 7
    %v458 = vsub.s32 0, %v457
    %v459 = vrot.slane %v454, %v458
    %v461 = vadd.f32 %v422, %v459
    %v462 = vadd.f32 %v423, %v459
    %v463 = vadd.f32 %v424, %v459
    %v464 = vadd.f32 %v425, %v459
    %v465 = vadd.f32 %v426, %v459
    %v466 = vadd.f32 %v427, %v459
    %v467 = vadd.f32 %v428, %v459
    %v468 = vadd.f32 %v429, %v459
    %v469 = vadd.f32 %v430, %v459
    %v470 = vadd.f32 %v431, %v459
    %v471 = vadd.f32 %v432, %v459
    %v472 = vadd.f32 %v433, %v459
    %v473 = vadd.f32 %v434, %v459
    %v474 = vadd.f32 %v435, %v459
    %v475 = vadd.f32 %v436, %v459
    %v476 = vadd.f32 %v437, %v459
    %v477 = vadd.f32 %v438, %v459
    %v478 = vadd.f32 %v439, %v459
    %v479 = vadd.f32 %v440, %v459
    %v480 = vadd.f32 %v441, %v459
    %v481 = vadd.f32 %v442, %v459
    %v482 = vadd.f32 %v443, %v459
    %v483 = vadd.f32 %v444, %v459
    %v484 = vadd.f32 %v445, %v459
    %v485 = vadd.f32 %v446, %v459
    %v486 = vadd.f32 %v447, %v459
    %v487 = vadd.f32 %v448, %v459
    %v488 = vadd.f32 %v449, %v459
    %v489 = vadd.f32 %v450, %v459
    %v490 = vadd.f32 %v451, %v459
    %v491 = vadd.f32 %v452, %v459
    %v492 = vadd.f32 %v453, %v459
    %v493 = vpack.c.bf16 %v462, %v461
    %v494 = vpack.c.bf16 %v464, %v463
    %v495 = vpack.c.bf16 %v466, %v465
    %v496 = vpack.c.bf16 %v468, %v467
    %v497 = vpack.c.bf16 %v470, %v469
    %v498 = vpack.c.bf16 %v472, %v471
    %v499 = vpack.c.bf16 %v474, %v473
    %v500 = vpack.c.bf16 %v476, %v475
    %v501 = vpack.c.bf16 %v478, %v477
    %v502 = vpack.c.bf16 %v480, %v479
    %v503 = vpack.c.bf16 %v482, %v481
    %v504 = vpack.c.bf16 %v484, %v483
    %v505 = vpack.c.bf16 %v486, %v485
    %v506 = vpack.c.bf16 %v488, %v487
    %v507 = vpack.c.bf16 %v490, %v489
    %v508 = vpack.c.bf16 %v492, %v491
    %v525 = vunpack.c.l.b16 %v493
    %v526 = vunpack.c.h.b16 %v493
    %v527 = vunpack.c.l.b16 %v494
    %v528 = vunpack.c.h.b16 %v494
    %v529 = vunpack.c.l.b16 %v495
    %v530 = vunpack.c.h.b16 %v495
    %v531 = vunpack.c.l.b16 %v496
    %v532 = vunpack.c.h.b16 %v496
    %v533 = vunpack.c.l.b16 %v497
    %v534 = vunpack.c.h.b16 %v497
    %v535 = vunpack.c.l.b16 %v498
    %v536 = vunpack.c.h.b16 %v498
    %v537 = vunpack.c.l.b16 %v499
    %v538 = vunpack.c.h.b16 %v499
    %v539 = vunpack.c.l.b16 %v500
    %v540 = vunpack.c.h.b16 %v500
    %v541 = vunpack.c.l.b16 %v501
    %v542 = vunpack.c.h.b16 %v501
    %v543 = vunpack.c.l.b16 %v502
    %v544 = vunpack.c.h.b16 %v502
    %v545 = vunpack.c.l.b16 %v503
    %v546 = vunpack.c.h.b16 %v503
    %v547 = vunpack.c.l.b16 %v504
    %v548 = vunpack.c.h.b16 %v504
    %v549 = vunpack.c.l.b16 %v505
    %v550 = vunpack.c.h.b16 %v505
    %v551 = vunpack.c.l.b16 %v506
    %v552 = vunpack.c.h.b16 %v506
    %v553 = vunpack.c.l.b16 %v507
    %v554 = vunpack.c.h.b16 %v507
    %v555 = vunpack.c.l.b16 %v508
    %v556 = vunpack.c.h.b16 %v508
    %v557 = vpack.c.b16 %v525, %v525
    %v558 = vpack.c.b16 %v526, %v526
    %v559 = vpack.c.b16 %v527, %v527
    %v560 = vpack.c.b16 %v528, %v528
    %v561 = vpack.c.b16 %v529, %v529
    %v562 = vpack.c.b16 %v530, %v530
    %v563 = vpack.c.b16 %v531, %v531
    %v564 = vpack.c.b16 %v532, %v532
    %v565 = vpack.c.b16 %v533, %v533
    %v566 = vpack.c.b16 %v534, %v534
    %v567 = vpack.c.b16 %v535, %v535
    %v568 = vpack.c.b16 %v536, %v536
    %v569 = vpack.c.b16 %v537, %v537
    %v570 = vpack.c.b16 %v538, %v538
    %v571 = vpack.c.b16 %v539, %v539
    %v572 = vpack.c.b16 %v540, %v540
    %v573 = vpack.c.b16 %v541, %v541
    %v574 = vpack.c.b16 %v542, %v542
    %v575 = vpack.c.b16 %v543, %v543
    %v576 = vpack.c.b16 %v544, %v544
    %v577 = vpack.c.b16 %v545, %v545
    %v578 = vpack.c.b16 %v546, %v546
    %v579 = vpack.c.b16 %v547, %v547
    %v580 = vpack.c.b16 %v548, %v548
    %v581 = vpack.c.b16 %v549, %v549
    %v582 = vpack.c.b16 %v550, %v550
    %v583 = vpack.c.b16 %v551, %v551
    %v584 = vpack.c.b16 %v552, %v552
    %v585 = vpack.c.b16 %v553, %v553
    %v586 = vpack.c.b16 %v554, %v554
    %v587 = vpack.c.b16 %v555, %v555
    %v588 = vpack.c.b16 %v556, %v556
    %621 = vst [vmem:[%s3] sm:$0xf] %v557
    %622 = vst [vmem:[%s3 + $0x4] sm:$0xf] %v558
    %623 = vst [vmem:[%s3 + $0x8] sm:$0xf] %v559
    %624 = vst [vmem:[%s3 + $0xc] sm:$0xf] %v560
    %625 = vst [vmem:[%s3 + $0x10] sm:$0xf] %v561
    %626 = vst [vmem:[%s3 + $0x14] sm:$0xf] %v562
    %627 = vst [vmem:[%s3 + $0x18] sm:$0xf] %v563
    %628 = vst [vmem:[%s3 + $0x1c] sm:$0xf] %v564
    %629 = vst [vmem:[%s3 + $0x20] sm:$0xf] %v565
    %630 = vst [vmem:[%s3 + $0x24] sm:$0xf] %v566
    %631 = vst [vmem:[%s3 + $0x28] sm:$0xf] %v567
    %632 = vst [vmem:[%s3 + $0x2c] sm:$0xf] %v568
    %633 = vst [vmem:[%s3 + $0x30] sm:$0xf] %v569
    %634 = vst [vmem:[%s3 + $0x34] sm:$0xf] %v570
    %635 = vst [vmem:[%s3 + $0x38] sm:$0xf] %v571
    %636 = vst [vmem:[%s3 + $0x3c] sm:$0xf] %v572
    %637 = vst [vmem:[%s3 + $0x40] sm:$0xf] %v573
    %638 = vst [vmem:[%s3 + $0x44] sm:$0xf] %v574
    %639 = vst [vmem:[%s3 + $0x48] sm:$0xf] %v575
    %640 = vst [vmem:[%s3 + $0x4c] sm:$0xf] %v576
    %641 = vst [vmem:[%s3 + $0x50] sm:$0xf] %v577
    %642 = vst [vmem:[%s3 + $0x54] sm:$0xf] %v578
    %643 = vst [vmem:[%s3 + $0x58] sm:$0xf] %v579
    %644 = vst [vmem:[%s3 + $0x5c] sm:$0xf] %v580
    %645 = vst [vmem:[%s3 + $0x60] sm:$0xf] %v581
    %646 = vst [vmem:[%s3 + $0x64] sm:$0xf] %v582
    %647 = vst [vmem:[%s3 + $0x68] sm:$0xf] %v583
    %648 = vst [vmem:[%s3 + $0x6c] sm:$0xf] %v584
    %649 = vst [vmem:[%s3 + $0x70] sm:$0xf] %v585
    %650 = vst [vmem:[%s3 + $0x74] sm:$0xf] %v586
    %651 = vst [vmem:[%s3 + $0x78] sm:$0xf] %v587
    %652 = vst [vmem:[%s3 + $0x7c] sm:$0xf] %v588
  $region21: #{gcn_v1_forward.3} parent=0 // pred_fallthru
    _
  // Predicated region
  $region22: #{gcn_v1_forward.3} parent=0 // pred_check
    _
  $region23: #{gcn_v1_forward.3} parent=0 // pred_check_branch
    %654 = sbr.rel (0) target = $region25
  $region24: #{gcn_v1_forward.3} parent=0 // pred_region
    _
  $region25: #{gcn_v1_forward.3} parent=0 // pred_fallthru
    _
  // Predicated region
  $region26: #{gcn_v1_forward.3} parent=0 // pred_check
    _
  $region27: #{gcn_v1_forward.3} parent=0 // pred_check_branch
    %656 = sbr.rel (0) target = $region29
  $region28: #{gcn_v1_forward.3} parent=0 // pred_region
    _
  $region29: #{gcn_v1_forward.3} parent=0 // pred_fallthru
    _

// kernel: gcn_v1_forward.4
$region0: #{gcn_v1_forward.4}
  #allocation0 [shape = 'u32[]', space=smem, size = 0x4, offset = 0x4, fixed_abs, tag = 'smem constant byte address 0x4 - core index']
  #allocation1 [shape = 'u32[144,128]{1,0:T(1,128)}', space=vmem, size = 0x12000, scoped, tag = 'internal scratch']
  #allocation2 [shape = 'f32[128,128]{1,0:T(8,128)}', space=vmem, size = 0x10000, scoped, tag = 'scratch operand']
  %s0 = inlined_call_operand.vmem [shape: bf16[256,256], index: 0, kind: input, shape index: {}]
  %s1 = inlined_call_operand.vmem [shape: bf16[256,128], index: 1, kind: input, shape index: {}]
  %s2 = inlined_call_operand.vmem [shape: f32[128,128], index: 2, kind: input, shape index: {}]
  %s3 = inlined_call_operand.vmem [shape: f32[1,128], index: 3, kind: input, shape index: {}]
  %s4 = inlined_call_operand.vmem [shape: bf16[256,128], index: 4, kind: output, shape index: {}]
  %s5 = sld [smem:[#allocation0]]
  $region57: #{gcn_v1_forward.4} parent=0
    _
  %s7 = ssub.s32 1, %s5
  %s8 = scalar_select 0, %s7, %s5
  loop: start=0, step=1, limit=4
  $region2: #{gcn_v1_forward.4} parent=0 // loop_pre_header
    _
  $region3: #{gcn_v1_forward.4} parent=0 // loop_header
    %s10 = sphi 0, %s14
    %p11 = scmp.ge.s32.totalorder %s10, 4
    %s17 = sphi 0, %s29
    %s18 = sphi 0, %s25
    %s19 = sphi 0, %s17
    %s20 = sphi 0, %s18
    %s21 = sphi 0, %s19
    %s22 = sphi 0, %s20
    %s34 = sphi 0, %s36
    %s37 = sphi 0, %s34
    %s38 = sphi 0, %s37
    %s54 = sphi 0, %s38
    %s58 = sphi 0, %s58
    %s60 = sphi 0, %s58
    %s61 = sphi 0, %s60
    %s75 = sphi 0, %s61
    %s79 = sphi 0, %s79
    %s81 = sphi 0, %s79
    %s82 = sphi 0, %s81
    %s96 = sphi 0, %s82
    %s100 = sphi 0, %s100
    %s102 = sphi 0, %s100
    %s103 = sphi 0, %s102
    %s117 = sphi 0, %s103
    %s123 = sphi 0, %s125
    %s126 = sphi 0, %s123
    %s127 = sphi 0, %s126
    %s143 = sphi 0, %s127
  $region4: #{gcn_v1_forward.4} parent=0 // loop_header_branch
    %13 = sbr.rel (%p11) target = $region8
  $region5: #{gcn_v1_forward.4} parent=0 // loop_body
    %s15 = ssub.s32 %s10, 1
    %s16 = ssub.s32 %s10, 2
    %s23 = sadd.s32 1, %s18
    %p24 = scmp.ge.s32.totalorder %s23, 1
    %s25 = scalar_select %p24, 0, %s23
    %s26 = sadd.s32 1, %s17
    %s27 = scalar_select %p24, %s26, %s17
    %p28 = scmp.ge.s32.totalorder %s27, 2
    %s29 = scalar_select %p28, 0, %s27
    %s30 = ssub.s32 %s17, %s29
    %s31 = ssub.s32 %s18, %s25
    %s32 = sor.u32 %s30, %s31
    %p33 = scmp.eq.s32.totalorder %s32, 0
    %s35 = sadd.s32 %s34, 1
    %s36 = scalar_select %p33, %s34, %s35
    %p39 = pneg %p33
    %p40 = scmp.eq.s32.totalorder %s10, 1
    %p41 = por %p39, %p40
    %p42 = scmp.ne.s32.totalorder %s34, %s37
    %p43 = scmp.eq.s32.totalorder %s10, 0
    %p44 = por %p42, %p43
    %p45 = scmp.ne.s32.totalorder %s34, %s37
    %p46 = scmp.eq.s32.totalorder %s15, 1
    %p47 = por %p45, %p46
    %p48 = scmp.ne.s32.totalorder %s37, %s38
    %p49 = scmp.eq.s32.totalorder %s15, 0
    %p50 = por %p48, %p49
    %p51 = scmp.ne.s32.totalorder %s37, %s38
    %p52 = scmp.eq.s32.totalorder %s16, 1
    %p53 = por %p51, %p52
    %p55 = scmp.ne.s32.totalorder %s38, %s54
    %p56 = scmp.eq.s32.totalorder %s16, 0
    %p57 = por %p55, %p56
    %s59 = sadd.s32 %s58, 1
    %p62 = scmp.eq.s32.totalorder %s10, 1
    %p63 = scmp.ne.s32.totalorder %s58, %s60
    %p64 = scmp.eq.s32.totalorder %s10, 0
    %p65 = por %p63, %p64
    %p66 = scmp.ne.s32.totalorder %s58, %s60
    %p67 = scmp.eq.s32.totalorder %s15, 1
    %p68 = por %p66, %p67
    %p69 = scmp.ne.s32.totalorder %s60, %s61
    %p70 = scmp.eq.s32.totalorder %s15, 0
    %p71 = por %p69, %p70
    %p72 = scmp.ne.s32.totalorder %s60, %s61
    %p73 = scmp.eq.s32.totalorder %s16, 1
    %p74 = por %p72, %p73
    %p76 = scmp.ne.s32.totalorder %s61, %s75
    %p77 = scmp.eq.s32.totalorder %s16, 0
    %p78 = por %p76, %p77
    %s80 = sadd.s32 %s79, 1
    %p83 = scmp.eq.s32.totalorder %s10, 1
    %p84 = scmp.ne.s32.totalorder %s79, %s81
    %p85 = scmp.eq.s32.totalorder %s10, 0
    %p86 = por %p84, %p85
    %p87 = scmp.ne.s32.totalorder %s79, %s81
    %p88 = scmp.eq.s32.totalorder %s15, 1
    %p89 = por %p87, %p88
    %p90 = scmp.ne.s32.totalorder %s81, %s82
    %p91 = scmp.eq.s32.totalorder %s15, 0
    %p92 = por %p90, %p91
    %p93 = scmp.ne.s32.totalorder %s81, %s82
    %p94 = scmp.eq.s32.totalorder %s16, 1
    %p95 = por %p93, %p94
    %p97 = scmp.ne.s32.totalorder %s82, %s96
    %p98 = scmp.eq.s32.totalorder %s16, 0
    %p99 = por %p97, %p98
    %s101 = sadd.s32 %s100, 1
    %p104 = scmp.eq.s32.totalorder %s10, 1
    %p105 = scmp.ne.s32.totalorder %s100, %s102
    %p106 = scmp.eq.s32.totalorder %s10, 0
    %p107 = por %p105, %p106
    %p108 = scmp.ne.s32.totalorder %s100, %s102
    %p109 = scmp.eq.s32.totalorder %s15, 1
    %p110 = por %p108, %p109
    %p111 = scmp.ne.s32.totalorder %s102, %s103
    %p112 = scmp.eq.s32.totalorder %s15, 0
    %p113 = por %p111, %p112
    %p114 = scmp.ne.s32.totalorder %s102, %s103
    %p115 = scmp.eq.s32.totalorder %s16, 1
    %p116 = por %p114, %p115
    %p118 = scmp.ne.s32.totalorder %s103, %s117
    %p119 = scmp.eq.s32.totalorder %s16, 0
    %p120 = por %p118, %p119
    %s121 = ssub.s32 %s17, %s29
    %p122 = scmp.eq.s32.totalorder %s121, 0
    %s124 = sadd.s32 %s123, 1
    %s125 = scalar_select %p122, %s123, %s124
    %p128 = pneg %p122
    %p129 = scmp.eq.s32.totalorder %s10, 1
    %p130 = por %p128, %p129
    %p131 = scmp.ne.s32.totalorder %s123, %s126
    %p132 = scmp.eq.s32.totalorder %s10, 0
    %p133 = por %p131, %p132
    %p134 = scmp.ne.s32.totalorder %s123, %s126
    %p135 = scmp.eq.s32.totalorder %s15, 1
    %p136 = por %p134, %p135
    %p137 = scmp.ne.s32.totalorder %s126, %s127
    %p138 = scmp.eq.s32.totalorder %s15, 0
    %p139 = por %p137, %p138
    %p140 = scmp.ne.s32.totalorder %s126, %s127
    %p141 = scmp.eq.s32.totalorder %s16, 1
    %p142 = por %p140, %p141
    %p144 = scmp.ne.s32.totalorder %s127, %s143
    %p145 = scmp.eq.s32.totalorder %s16, 0
    %p146 = por %p144, %p145
    %p147 = scmp.le.s32.totalorder 1, %s10
    %p148 = scmp.lt.s32.totalorder %s10, 3
    %p149 = pnand %p147, %p148
    %p150 = pneg %p149
    // Predicated region
    $region9: #{gcn_v1_forward.4} parent=5 // pred_check
      _
    $region10: #{gcn_v1_forward.4} parent=5 // pred_check_branch
      %152 = sbr.rel (%p149) target = $region12
    $region11: #{gcn_v1_forward.4} parent=5 // pred_region
      %s153 = ssub.s32 %s10, 1
      // Predicated region
      $region13: #{gcn_v1_forward.4} parent=11 // pred_check
        %p154 = pneg %p71
      $region14: #{gcn_v1_forward.4} parent=11 // pred_check_branch
        %156 = sbr.rel (%p154) target = $region16
      $region15: #{gcn_v1_forward.4} parent=11 // pred_region
        _
      $region16: #{gcn_v1_forward.4} parent=11 // pred_fallthru
        _
      // Predicated region
      $region17: #{gcn_v1_forward.4} parent=11 // pred_check
        %p157 = pneg %p92
      $region18: #{gcn_v1_forward.4} parent=11 // pred_check_branch
        %159 = sbr.rel (%p157) target = $region20
      $region19: #{gcn_v1_forward.4} parent=11 // pred_region
        _
      $region20: #{gcn_v1_forward.4} parent=11 // pred_fallthru
        _
      // Predicated region
      $region21: #{gcn_v1_forward.4} parent=11 // pred_check
        %p160 = pneg %p113
      $region22: #{gcn_v1_forward.4} parent=11 // pred_check_branch
        %162 = sbr.rel (%p160) target = $region24
      $region23: #{gcn_v1_forward.4} parent=11 // pred_region
        _
      $region24: #{gcn_v1_forward.4} parent=11 // pred_fallthru
        _
    $region12: #{gcn_v1_forward.4} parent=5 // pred_fallthru
      _
    %p163 = scmp.lt.s32.totalorder %s10, 2
    // Predicated region
    $region25: #{gcn_v1_forward.4} parent=5 // pred_check
      %p164 = pneg %p163
    $region26: #{gcn_v1_forward.4} parent=5 // pred_check_branch
      %166 = sbr.rel (%p164) target = $region28
    $region27: #{gcn_v1_forward.4} parent=5 // pred_region
      // Predicated region
      $region29: #{gcn_v1_forward.4} parent=27 // pred_check
        %p167 = pneg %p44
      $region30: #{gcn_v1_forward.4} parent=27 // pred_check_branch
        %169 = sbr.rel (%p167) target = $region32
      $region31: #{gcn_v1_forward.4} parent=27 // pred_region
        %s170 = smul.u32 16, %s17
        %s171 = smul.u32 2, %s18
        %p172 = scmp.lt.s32.totalorder %s170, 31
        %s173 = scalar_select %p172, %s170, 31
        %p174 = scmp.lt.s32.totalorder %s171, 1
        %s175 = scalar_select %p174, %s171, 1
        %s176 = smul.addr %s173, 2
        %s177 = sadd.s32 %s175, %s176
        %s178 = smul.addr %s177, 4
        %s179 = scalar_lea.vmem %s0, %s178
        %s180 = smul.u32 16, %s17
        %s181 = smul.u32 2, %s18
      $region32: #{gcn_v1_forward.4} parent=27 // pred_fallthru
        _
    $region28: #{gcn_v1_forward.4} parent=5 // pred_fallthru
      _
    %p182 = scmp.le.s32.totalorder 1, %s10
    %p183 = scmp.lt.s32.totalorder %s10, 3
    %p184 = pnand %p182, %p183
    %p185 = pneg %p184
    // Predicated region
    $region33: #{gcn_v1_forward.4} parent=5 // pred_check
      _
    $region34: #{gcn_v1_forward.4} parent=5 // pred_check_branch
      %187 = sbr.rel (%p184) target = $region36
    $region35: #{gcn_v1_forward.4} parent=5 // pred_region
      %s188 = ssub.s32 %s10, 1
      %s189 = smul.u32 16, %s19
      %s190 = smul.u32 2, %s20
      %p191 = scmp.lt.s32.totalorder %s189, 31
      %s192 = scalar_select %p191, %s189, 31
      %p193 = scmp.lt.s32.totalorder %s190, 1
      %s194 = scalar_select %p193, %s190, 1
      %s195 = smul.addr %s192, 2
      %s196 = sadd.s32 %s194, %s195
      %s197 = smul.addr %s196, 4
      %s198 = scalar_lea.vmem %s0, %s197
      %p199 = pneg %p50
      %p200 = pneg %p47
      %p201 = pneg %p71
      %p202 = pneg %p68
      %p203 = pneg %p92
      %p204 = pneg %p89
      %p205 = pneg %p113
      %p206 = pneg %p110
      %p207 = pneg %p139
      %p208 = pneg %p136
      %s209 = smul.u32 16, %s19
      %p210 = scmp.lt.s32.totalorder %s209, 31
      %s211 = scalar_select %p210, %s209, 31
      %s212 = smul.addr %s211, 4
      %s213 = scalar_lea.vmem %s4, %s212
      %s214 = smul.u32 16, %s19
      %s215 = smul.u32 2, %s20
      %p216 = scmp.lt.s32.totalorder %s214, 31
      %s217 = scalar_select %p216, %s214, 31
      %p218 = scmp.lt.s32.totalorder %s215, 1
      %s219 = scalar_select %p218, %s215, 1
      %s220 = smul.addr %s217, 2
      %s221 = sadd.s32 %s219, %s220
      %s222 = smul.addr %s221, 4
      %s223 = scalar_lea.vmem %s0, %s222
      %s224 = smul.u32 16, %s19
      %s225 = smul.u32 2, %s20
      %s226 = smul.u32 16, %s19
      %p227 = scmp.lt.s32.totalorder %s226, 31
      %s228 = scalar_select %p227, %s226, 31
      %s229 = smul.addr %s228, 4
      %s230 = scalar_lea.vmem %s4, %s229
      %s231 = smul.u32 16, %s19
      %p233 = scmp.eq.s32.totalorder %s20, 0
      // Predicated region
      $region37: #{gcn_v1_forward.4} parent=35 // pred_check
        %p234 = pneg %p233
      $region38: #{gcn_v1_forward.4} parent=35 // pred_check_branch
        %236 = sbr.rel (%p234) target = $region40
      $region39: #{gcn_v1_forward.4} parent=35 // pred_region
        %237 = vst [vmem:[#allocation2] sm:$0xff] 0.0
        %238 = vst [vmem:[#allocation2 + $0x8] sm:$0xff] 0.0
        %239 = vst [vmem:[#allocation2 + $0x10] sm:$0xff] 0.0
        %240 = vst [vmem:[#allocation2 + $0x18] sm:$0xff] 0.0
        %241 = vst [vmem:[#allocation2 + $0x20] sm:$0xff] 0.0
        %242 = vst [vmem:[#allocation2 + $0x28] sm:$0xff] 0.0
        %243 = vst [vmem:[#allocation2 + $0x30] sm:$0xff] 0.0
        %244 = vst [vmem:[#allocation2 + $0x38] sm:$0xff] 0.0
        %245 = vst [vmem:[#allocation2 + $0x40] sm:$0xff] 0.0
        %246 = vst [vmem:[#allocation2 + $0x48] sm:$0xff] 0.0
        %247 = vst [vmem:[#allocation2 + $0x50] sm:$0xff] 0.0
        %248 = vst [vmem:[#allocation2 + $0x58] sm:$0xff] 0.0
        %249 = vst [vmem:[#allocation2 + $0x60] sm:$0xff] 0.0
        %250 = vst [vmem:[#allocation2 + $0x68] sm:$0xff] 0.0
        %251 = vst [vmem:[#allocation2 + $0x70] sm:$0xff] 0.0
        %252 = vst [vmem:[#allocation2 + $0x78] sm:$0xff] 0.0
      $region40: #{gcn_v1_forward.4} parent=35 // pred_fallthru
        _
      %s253 = smul.u32 %s20, 256
      %s254 = sshra.s32 %s253, 3
      %s255 = sand.u32 %s253, 7
      %s256 = smul.addr %s254, 4
      %s257 = scalar_lea.vmem %s1, %s256
      %v258 = vld [vmem:[%s257] sm:$0xf]
      %v259 = vld [vmem:[%s257 + $0x4] sm:$0xf]
      %v260 = vld [vmem:[%s257 + $0x8] sm:$0xf]
      %v261 = vld [vmem:[%s257 + $0xc] sm:$0xf]
      %v262 = vld [vmem:[%s257 + $0x10] sm:$0xf]
      %v263 = vld [vmem:[%s257 + $0x14] sm:$0xf]
      %v264 = vld [vmem:[%s257 + $0x18] sm:$0xf]
      %v265 = vld [vmem:[%s257 + $0x1c] sm:$0xf]
      %v266 = vld [vmem:[%s257 + $0x20] sm:$0xf]
      %v267 = vld [vmem:[%s257 + $0x24] sm:$0xf]
      %v268 = vld [vmem:[%s257 + $0x28] sm:$0xf]
      %v269 = vld [vmem:[%s257 + $0x2c] sm:$0xf]
      %v270 = vld [vmem:[%s257 + $0x30] sm:$0xf]
      %v271 = vld [vmem:[%s257 + $0x34] sm:$0xf]
      %v272 = vld [vmem:[%s257 + $0x38] sm:$0xf]
      %v273 = vld [vmem:[%s257 + $0x3c] sm:$0xf]
      %v274 = vld [vmem:[%s257 + $0x40] sm:$0xf]
      %v275 = vld [vmem:[%s257 + $0x44] sm:$0xf]
      %v276 = vld [vmem:[%s257 + $0x48] sm:$0xf]
      %v277 = vld [vmem:[%s257 + $0x4c] sm:$0xf]
      %v278 = vld [vmem:[%s257 + $0x50] sm:$0xf]
      %v279 = vld [vmem:[%s257 + $0x54] sm:$0xf]
      %v280 = vld [vmem:[%s257 + $0x58] sm:$0xf]
      %v281 = vld [vmem:[%s257 + $0x5c] sm:$0xf]
      %v282 = vld [vmem:[%s257 + $0x60] sm:$0xf]
      %v283 = vld [vmem:[%s257 + $0x64] sm:$0xf]
      %v284 = vld [vmem:[%s257 + $0x68] sm:$0xf]
      %v285 = vld [vmem:[%s257 + $0x6c] sm:$0xf]
      %v286 = vld [vmem:[%s257 + $0x70] sm:$0xf]
      %v287 = vld [vmem:[%s257 + $0x74] sm:$0xf]
      %v288 = vld [vmem:[%s257 + $0x78] sm:$0xf]
      %v289 = vld [vmem:[%s257 + $0x7c] sm:$0xf]
      %v290 = vld [vmem:[#allocation2] sm:$0xff]
      %v291 = vld [vmem:[#allocation2 + $0x8] sm:$0xff]
      %v292 = vld [vmem:[#allocation2 + $0x10] sm:$0xff]
      %v293 = vld [vmem:[#allocation2 + $0x18] sm:$0xff]
      %v294 = vld [vmem:[#allocation2 + $0x20] sm:$0xff]
      %v295 = vld [vmem:[#allocation2 + $0x28] sm:$0xff]
      %v296 = vld [vmem:[#allocation2 + $0x30] sm:$0xff]
      %v297 = vld [vmem:[#allocation2 + $0x38] sm:$0xff]
      %v298 = vld [vmem:[#allocation2 + $0x40] sm:$0xff]
      %v299 = vld [vmem:[#allocation2 + $0x48] sm:$0xff]
      %v300 = vld [vmem:[#allocation2 + $0x50] sm:$0xff]
      %v301 = vld [vmem:[#allocation2 + $0x58] sm:$0xff]
      %v302 = vld [vmem:[#allocation2 + $0x60] sm:$0xff]
      %v303 = vld [vmem:[#allocation2 + $0x68] sm:$0xff]
      %v304 = vld [vmem:[#allocation2 + $0x70] sm:$0xff]
      %v305 = vld [vmem:[#allocation2 + $0x78] sm:$0xff]
      %v306 = vld [vmem:[%s223] sm:$0xff]
      %v307 = vld [vmem:[%s223 + $0x8] sm:$0xff]
      %v308 = vld [vmem:[%s223 + $0x10] sm:$0xff]
      %v309 = vld [vmem:[%s223 + $0x18] sm:$0xff]
      %v310 = vld [vmem:[%s223 + $0x20] sm:$0xff]
      %v311 = vld [vmem:[%s223 + $0x28] sm:$0xff]
      %v312 = vld [vmem:[%s223 + $0x30] sm:$0xff]
      %v313 = vld [vmem:[%s223 + $0x38] sm:$0xff]
      %v314 = vld [vmem:[%s223 + $0x40] sm:$0xff]
      %v315 = vld [vmem:[%s223 + $0x48] sm:$0xff]
      %v316 = vld [vmem:[%s223 + $0x50] sm:$0xff]
      %v317 = vld [vmem:[%s223 + $0x58] sm:$0xff]
      %v318 = vld [vmem:[%s223 + $0x60] sm:$0xff]
      %v319 = vld [vmem:[%s223 + $0x68] sm:$0xff]
      %v320 = vld [vmem:[%s223 + $0x70] sm:$0xff]
      %v321 = vld [vmem:[%s223 + $0x78] sm:$0xff]
      %v338 = vunpack.c.l.b16 %v306
      %v339 = vunpack.c.h.b16 %v306
      %v340 = vunpack.c.l.b16 %v307
      %v341 = vunpack.c.h.b16 %v307
      %v342 = vunpack.c.l.b16 %v308
      %v343 = vunpack.c.h.b16 %v308
      %v344 = vunpack.c.l.b16 %v309
      %v345 = vunpack.c.h.b16 %v309
      %v346 = vunpack.c.l.b16 %v310
      %v347 = vunpack.c.h.b16 %v310
      %v348 = vunpack.c.l.b16 %v311
      %v349 = vunpack.c.h.b16 %v311
      %v350 = vunpack.c.l.b16 %v312
      %v351 = vunpack.c.h.b16 %v312
      %v352 = vunpack.c.l.b16 %v313
      %v353 = vunpack.c.h.b16 %v313
      %v354 = vunpack.c.l.b16 %v314
      %v355 = vunpack.c.h.b16 %v314
      %v356 = vunpack.c.l.b16 %v315
      %v357 = vunpack.c.h.b16 %v315
      %v358 = vunpack.c.l.b16 %v316
      %v359 = vunpack.c.h.b16 %v316
      %v360 = vunpack.c.l.b16 %v317
      %v361 = vunpack.c.h.b16 %v317
      %v362 = vunpack.c.l.b16 %v318
      %v363 = vunpack.c.h.b16 %v318
      %v364 = vunpack.c.l.b16 %v319
      %v365 = vunpack.c.h.b16 %v319
      %v366 = vunpack.c.l.b16 %v320
      %v367 = vunpack.c.h.b16 %v320
      %v368 = vunpack.c.l.b16 %v321
      %v369 = vunpack.c.h.b16 %v321
      %v370 = vpack.c.b16 %v340, %v338
      %v371 = vpack.c.b16 %v341, %v339
      %v372 = vpack.c.b16 %v344, %v342
      %v373 = vpack.c.b16 %v345, %v343
      %v374 = vpack.c.b16 %v348, %v346
      %v375 = vpack.c.b16 %v349, %v347
      %v376 = vpack.c.b16 %v352, %v350
      %v377 = vpack.c.b16 %v353, %v351
      %v378 = vpack.c.b16 %v356, %v354
      %v379 = vpack.c.b16 %v357, %v355
      %v380 = vpack.c.b16 %v360, %v358
      %v381 = vpack.c.b16 %v361, %v359
      %v382 = vpack.c.b16 %v364, %v362
      %v383 = vpack.c.b16 %v365, %v363
      %v384 = vpack.c.b16 %v368, %v366
      %v385 = vpack.c.b16 %v369, %v367
      %v434 = vunpack.c.l.b16 %v258
      %v435 = vunpack.c.l.b16 %v259
      %v436 = vunpack.c.l.b16 %v260
      %v437 = vunpack.c.l.b16 %v261
      %v438 = vunpack.c.l.b16 %v262
      %v439 = vunpack.c.l.b16 %v263
      %v440 = vunpack.c.l.b16 %v264
      %v441 = vunpack.c.l.b16 %v265
      %v442 = vunpack.c.l.b16 %v266
      %v443 = vunpack.c.l.b16 %v267
      %v444 = vunpack.c.l.b16 %v268
      %v445 = vunpack.c.l.b16 %v269
      %v446 = vunpack.c.l.b16 %v270
      %v447 = vunpack.c.l.b16 %v271
      %v448 = vunpack.c.l.b16 %v272
      %v449 = vunpack.c.l.b16 %v273
      %v450 = vunpack.c.l.b16 %v274
      %v451 = vunpack.c.l.b16 %v275
      %v452 = vunpack.c.l.b16 %v276
      %v453 = vunpack.c.l.b16 %v277
      %v454 = vunpack.c.l.b16 %v278
      %v455 = vunpack.c.l.b16 %v279
      %v456 = vunpack.c.l.b16 %v280
      %v457 = vunpack.c.l.b16 %v281
      %v458 = vunpack.c.l.b16 %v282
      %v459 = vunpack.c.l.b16 %v283
      %v460 = vunpack.c.l.b16 %v284
      %v461 = vunpack.c.l.b16 %v285
      %v462 = vunpack.c.l.b16 %v286
      %v463 = vunpack.c.l.b16 %v287
      %v464 = vunpack.c.l.b16 %v288
      %v465 = vunpack.c.l.b16 %v289
      %v466 = vpack.c.b16 %v435, %v434
      %v467 = vpack.c.b16 %v437, %v436
      %v468 = vpack.c.b16 %v439, %v438
      %v469 = vpack.c.b16 %v441, %v440
      %v470 = vpack.c.b16 %v443, %v442
      %v471 = vpack.c.b16 %v445, %v444
      %v472 = vpack.c.b16 %v447, %v446
      %v473 = vpack.c.b16 %v449, %v448
      %v474 = vpack.c.b16 %v451, %v450
      %v475 = vpack.c.b16 %v453, %v452
      %v476 = vpack.c.b16 %v455, %v454
      %v477 = vpack.c.b16 %v457, %v456
      %v478 = vpack.c.b16 %v459, %v458
      %v479 = vpack.c.b16 %v461, %v460
      %v480 = vpack.c.b16 %v463, %v462
      %v481 = vpack.c.b16 %v465, %v464
      %498 = vmatprep.subr.bf16.mxu0 0
      %499 = vmatpush1.bf16.msra.mxu0 %v466
      %500 = vmatprep.subr.bf16.mxu0 0
      %501 = vmatpush1.bf16.msra.mxu0 %v467
      %502 = vmatprep.subr.bf16.mxu0 0
      %503 = vmatpush1.bf16.msra.mxu0 %v468
      %504 = vmatprep.subr.bf16.mxu0 0
      %505 = vmatpush1.bf16.msra.mxu0 %v469
      %506 = vmatprep.subr.bf16.mxu0 0
      %507 = vmatpush1.bf16.msra.mxu0 %v470
      %508 = vmatprep.subr.bf16.mxu0 0
      %509 = vmatpush1.bf16.msra.mxu0 %v471
      %510 = vmatprep.subr.bf16.mxu0 0
      %511 = vmatpush1.bf16.msra.mxu0 %v472
      %512 = vmatprep.subr.bf16.mxu0 0
      %513 = vmatpush1.bf16.msra.mxu0 %v473
      %514 = vmatprep.subr.bf16.mxu0 0
      %515 = vmatpush1.bf16.msra.mxu0 %v474
      %516 = vmatprep.subr.bf16.mxu0 0
      %517 = vmatpush1.bf16.msra.mxu0 %v475
      %518 = vmatprep.subr.bf16.mxu0 0
      %519 = vmatpush1.bf16.msra.mxu0 %v476
      %520 = vmatprep.subr.bf16.mxu0 0
      %521 = vmatpush1.bf16.msra.mxu0 %v477
      %522 = vmatprep.subr.bf16.mxu0 0
      %523 = vmatpush1.bf16.msra.mxu0 %v478
      %524 = vmatprep.subr.bf16.mxu0 0
      %525 = vmatpush1.bf16.msra.mxu0 %v479
      %526 = vmatprep.subr.bf16.mxu0 0
      %527 = vmatpush1.bf16.msra.mxu0 %v480
      %528 = vmatprep.subr.bf16.mxu0 0
      %529 = vmatpush1.bf16.msra.mxu0 %v481
      %530 = vmatprep.mubr.bf16.mxu0 %v371
      %531 = vmatmul.mubr.bf16.gmra.mrb[0].mxu0 %v370
      %v532 = vpop.f32.mrb[0].mxu0
      %v533 = vadd.f32 0.0, %v532
      %v534 = vpop.f32.mrb[0].mxu0
      %v535 = vpop.f32.mrb[0].mxu0
      %v536 = vadd.f32 0.0, %v535
      %v537 = vpop.f32.mrb[0].mxu0
      %538 = vmatprep.mubr.bf16.mxu0 %v373
      %539 = vmatmul.mubr.bf16.gmra.mrb[0].mxu0 %v372
      %v540 = vpop.f32.mrb[0].mxu0
      %v541 = vadd.f32 0.0, %v540
      %v542 = vpop.f32.mrb[0].mxu0
      %v543 = vpop.f32.mrb[0].mxu0
      %v544 = vadd.f32 0.0, %v543
      %v545 = vpop.f32.mrb[0].mxu0
      %546 = vmatprep.mubr.bf16.mxu0 %v375
      %547 = vmatmul.mubr.bf16.gmra.mrb[0].mxu0 %v374
      %v548 = vpop.f32.mrb[0].mxu0
      %v549 = vadd.f32 0.0, %v548
      %v550 = vpop.f32.mrb[0].mxu0
      %v551 = vpop.f32.mrb[0].mxu0
      %v552 = vadd.f32 0.0, %v551
      %v553 = vpop.f32.mrb[0].mxu0
      %554 = vmatprep.mubr.bf16.mxu0 %v377
      %555 = vmatmul.mubr.bf16.gmra.mrb[0].mxu0 %v376
      %v556 = vpop.f32.mrb[0].mxu0
      %v557 = vadd.f32 0.0, %v556
      %v558 = vpop.f32.mrb[0].mxu0
      %v559 = vpop.f32.mrb[0].mxu0
      %v560 = vadd.f32 0.0, %v559
      %v561 = vpop.f32.mrb[0].mxu0
      %562 = vmatprep.mubr.bf16.mxu0 %v379
      %563 = vmatmul.mubr.bf16.gmra.mrb[0].mxu0 %v378
      %v564 = vpop.f32.mrb[0].mxu0
      %v565 = vadd.f32 0.0, %v564
      %v566 = vpop.f32.mrb[0].mxu0
      %v567 = vpop.f32.mrb[0].mxu0
      %v568 = vadd.f32 0.0, %v567
      %v569 = vpop.f32.mrb[0].mxu0
      %570 = vmatprep.mubr.bf16.mxu0 %v381
      %571 = vmatmul.mubr.bf16.gmra.mrb[0].mxu0 %v380
      %v572 = vpop.f32.mrb[0].mxu0
      %v573 = vadd.f32 0.0, %v572
      %v574 = vpop.f32.mrb[0].mxu0
      %v575 = vpop.f32.mrb[0].mxu0
      %v576 = vadd.f32 0.0, %v575
      %v577 = vpop.f32.mrb[0].mxu0
      %578 = vmatprep.mubr.bf16.mxu0 %v383
      %579 = vmatmul.mubr.bf16.gmra.mrb[0].mxu0 %v382
      %v580 = vpop.f32.mrb[0].mxu0
      %v581 = vadd.f32 0.0, %v580
      %v582 = vpop.f32.mrb[0].mxu0
      %v583 = vpop.f32.mrb[0].mxu0
      %v584 = vadd.f32 0.0, %v583
      %v585 = vpop.f32.mrb[0].mxu0
      %586 = vmatprep.mubr.bf16.mxu0 %v385
      %587 = vmatmul.mubr.bf16.gmra.mrb[0].mxu0 %v384
      %v588 = vpop.f32.mrb[0].mxu0
      %v589 = vadd.f32 0.0, %v588
      %v590 = vpop.f32.mrb[0].mxu0
      %v591 = vpop.f32.mrb[0].mxu0
      %v592 = vadd.f32 0.0, %v591
      %v593 = vpop.f32.mrb[0].mxu0
      %594 = vdwg.mxu0
      %v595 = vadd.f32 %v290, %v533
      %v596 = vadd.f32 %v291, %v536
      %v597 = vadd.f32 %v292, %v541
      %v598 = vadd.f32 %v293, %v544
      %v599 = vadd.f32 %v294, %v549
      %v600 = vadd.f32 %v295, %v552
      %v601 = vadd.f32 %v296, %v557
      %v602 = vadd.f32 %v297, %v560
      %v603 = vadd.f32 %v298, %v565
      %v604 = vadd.f32 %v299, %v568
      %v605 = vadd.f32 %v300, %v573
      %v606 = vadd.f32 %v301, %v576
      %v607 = vadd.f32 %v302, %v581
      %v608 = vadd.f32 %v303, %v584
      %v609 = vadd.f32 %v304, %v589
      %v610 = vadd.f32 %v305, %v592
      %611 = vst [vmem:[#allocation2] sm:$0xff] %v595
      %612 = vst [vmem:[#allocation2 + $0x8] sm:$0xff] %v596
      %613 = vst [vmem:[#allocation2 + $0x10] sm:$0xff] %v597
      %614 = vst [vmem:[#allocation2 + $0x18] sm:$0xff] %v598
      %615 = vst [vmem:[#allocation2 + $0x20] sm:$0xff] %v599
      %616 = vst [vmem:[#allocation2 + $0x28] sm:$0xff] %v600
      %617 = vst [vmem:[#allocation2 + $0x30] sm:$0xff] %v601
      %618 = vst [vmem:[#allocation2 + $0x38] sm:$0xff] %v602
      %619 = vst [vmem:[#allocation2 + $0x40] sm:$0xff] %v603
      %620 = vst [vmem:[#allocation2 + $0x48] sm:$0xff] %v604
      %621 = vst [vmem:[#allocation2 + $0x50] sm:$0xff] %v605
      %622 = vst [vmem:[#allocation2 + $0x58] sm:$0xff] %v606
      %623 = vst [vmem:[#allocation2 + $0x60] sm:$0xff] %v607
      %624 = vst [vmem:[#allocation2 + $0x68] sm:$0xff] %v608
      %625 = vst [vmem:[#allocation2 + $0x70] sm:$0xff] %v609
      %626 = vst [vmem:[#allocation2 + $0x78] sm:$0xff] %v610
      // Predicated region
      $region41: #{gcn_v1_forward.4} parent=35 // pred_check
        %p627 = pneg %p233
      $region42: #{gcn_v1_forward.4} parent=35 // pred_check_branch
        %629 = sbr.rel (%p627) target = $region44
      $region43: #{gcn_v1_forward.4} parent=35 // pred_region
        %v630 = vld [vmem:[#allocation2] sm:$0xff]
        %v631 = vld [vmem:[#allocation2 + $0x8] sm:$0xff]
        %v632 = vld [vmem:[#allocation2 + $0x10] sm:$0xff]
        %v633 = vld [vmem:[#allocation2 + $0x18] sm:$0xff]
        %v634 = vld [vmem:[#allocation2 + $0x20] sm:$0xff]
        %v635 = vld [vmem:[#allocation2 + $0x28] sm:$0xff]
        %v636 = vld [vmem:[#allocation2 + $0x30] sm:$0xff]
        %v637 = vld [vmem:[#allocation2 + $0x38] sm:$0xff]
        %v638 = vld [vmem:[#allocation2 + $0x40] sm:$0xff]
        %v639 = vld [vmem:[#allocation2 + $0x48] sm:$0xff]
        %v640 = vld [vmem:[#allocation2 + $0x50] sm:$0xff]
        %v641 = vld [vmem:[#allocation2 + $0x58] sm:$0xff]
        %v642 = vld [vmem:[#allocation2 + $0x60] sm:$0xff]
        %v643 = vld [vmem:[#allocation2 + $0x68] sm:$0xff]
        %v644 = vld [vmem:[#allocation2 + $0x70] sm:$0xff]
        %v645 = vld [vmem:[#allocation2 + $0x78] sm:$0xff]
        %v646 = vld [vmem:[%s2] sm:$0xff]
        %v647 = vld [vmem:[%s2 + $0x8] sm:$0xff]
        %v648 = vld [vmem:[%s2 + $0x10] sm:$0xff]
        %v649 = vld [vmem:[%s2 + $0x18] sm:$0xff]
        %v650 = vld [vmem:[%s2 + $0x20] sm:$0xff]
        %v651 = vld [vmem:[%s2 + $0x28] sm:$0xff]
        %v652 = vld [vmem:[%s2 + $0x30] sm:$0xff]
        %v653 = vld [vmem:[%s2 + $0x38] sm:$0xff]
        %v654 = vld [vmem:[%s2 + $0x40] sm:$0xff]
        %v655 = vld [vmem:[%s2 + $0x48] sm:$0xff]
        %v656 = vld [vmem:[%s2 + $0x50] sm:$0xff]
        %v657 = vld [vmem:[%s2 + $0x58] sm:$0xff]
        %v658 = vld [vmem:[%s2 + $0x60] sm:$0xff]
        %v659 = vld [vmem:[%s2 + $0x68] sm:$0xff]
        %v660 = vld [vmem:[%s2 + $0x70] sm:$0xff]
        %v661 = vld [vmem:[%s2 + $0x78] sm:$0xff]
        %v662 = vld [vmem:[%s3] sm:$0x1]
        %v664 = vlaneseq
        %v665 = vshrl.u32 %v664, 7
        %v666 = vsub.s32 0, %v665
        %v667 = vrot.slane %v662, %v666
        %669 = vmatprep.subr.mxu0 0.0
        %670 = vmatpush1.msra.mxu0 %v646
        %671 = vmatprep.subr.mxu0 0.0
        %672 = vmatpush1.msra.mxu0 %v647
        %673 = vmatprep.subr.mxu0 0.0
        %674 = vmatpush1.msra.mxu0 %v648
        %675 = vmatprep.subr.mxu0 0.0
        %676 = vmatpush1.msra.mxu0 %v649
        %677 = vmatprep.subr.mxu0 0.0
        %678 = vmatpush1.msra.mxu0 %v650
        %679 = vmatprep.subr.mxu0 0.0
        %680 = vmatpush1.msra.mxu0 %v651
        %681 = vmatprep.subr.mxu0 0.0
        %682 = vmatpush1.msra.mxu0 %v652
        %683 = vmatprep.subr.mxu0 0.0
        %684 = vmatpush1.msra.mxu0 %v653
        %685 = vmatprep.subr.mxu0 0.0
        %686 = vmatpush1.msra.mxu0 %v654
        %687 = vmatprep.subr.mxu0 0.0
        %688 = vmatpush1.msra.mxu0 %v655
        %689 = vmatprep.subr.mxu0 0.0
        %690 = vmatpush1.msra.mxu0 %v656
        %691 = vmatprep.subr.mxu0 0.0
        %692 = vmatpush1.msra.mxu0 %v657
        %693 = vmatprep.subr.mxu0 0.0
        %694 = vmatpush1.msra.mxu0 %v658
        %695 = vmatprep.subr.mxu0 0.0
        %696 = vmatpush1.msra.mxu0 %v659
        %697 = vmatprep.subr.mxu0 0.0
        %698 = vmatpush1.msra.mxu0 %v660
        %699 = vmatprep.subr.mxu0 0.0
        %700 = vmatpush1.msra.mxu0 %v661
        %701 = vmatprep.subr.mxu0 0.0
        %702 = vmatpush1.msra.mxu0 0.0
        %703 = vmatprep.subr.mxu0 0.0
        %704 = vmatpush1.msra.mxu0 0.0
        %705 = vmatprep.subr.mxu0 0.0
        %706 = vmatpush1.msra.mxu0 0.0
        %707 = vmatprep.subr.mxu0 0.0
        %708 = vmatpush1.msra.mxu0 0.0
        %709 = vmatprep.subr.mxu0 0.0
        %710 = vmatpush1.msra.mxu0 0.0
        %711 = vmatprep.subr.mxu0 0.0
        %712 = vmatpush1.msra.mxu0 0.0
        %713 = vmatprep.subr.mxu0 0.0
        %714 = vmatpush1.msra.mxu0 0.0
        %715 = vmatprep.subr.mxu0 0.0
        %716 = vmatpush1.msra.mxu0 0.0
        %717 = vmatprep.subr.mxu0 0.0
        %718 = vmatpush1.msra.mxu0 0.0
        %719 = vmatprep.subr.mxu0 0.0
        %720 = vmatpush1.msra.mxu0 0.0
        %721 = vmatprep.subr.mxu0 0.0
        %722 = vmatpush1.msra.mxu0 0.0
        %723 = vmatprep.subr.mxu0 0.0
        %724 = vmatpush1.msra.mxu0 0.0
        %725 = vmatprep.subr.mxu0 0.0
        %726 = vmatpush1.msra.mxu0 0.0
        %727 = vmatprep.subr.mxu0 0.0
        %728 = vmatpush1.msra.mxu0 0.0
        %729 = vmatprep.subr.mxu0 0.0
        %730 = vmatpush1.msra.mxu0 0.0
        %731 = vmatprep.subr.mxu0 0.0
        %732 = vmatpush1.msra.mxu0 0.0
        %733 = vmatprep.mubr.f32.mxu0 0.0
        %734 = vmatmul.mubr.f32.gmra.mrb[0].mxu0 %v630
        %v735 = vpop.f32.mrb[0].mxu0
        %v736 = vadd.f32 %v667, %v735
        %v737 = vpop.f32.mrb[0].mxu0
        %738 = vmatprep.mubr.f32.mxu0 0.0
        %739 = vmatmul.mubr.f32.gmra.mrb[0].mxu0 %v631
        %v740 = vpop.f32.mrb[0].mxu0
        %v741 = vadd.f32 %v667, %v740
        %v742 = vpop.f32.mrb[0].mxu0
        %743 = vmatprep.mubr.f32.mxu0 0.0
        %744 = vmatmul.mubr.f32.gmra.mrb[0].mxu0 %v632
        %v745 = vpop.f32.mrb[0].mxu0
        %v746 = vadd.f32 %v667, %v745
        %v747 = vpop.f32.mrb[0].mxu0
        %748 = vmatprep.mubr.f32.mxu0 0.0
        %749 = vmatmul.mubr.f32.gmra.mrb[0].mxu0 %v633
        %v750 = vpop.f32.mrb[0].mxu0
        %v751 = vadd.f32 %v667, %v750
        %v752 = vpop.f32.mrb[0].mxu0
        %753 = vmatprep.mubr.f32.mxu0 0.0
        %754 = vmatmul.mubr.f32.gmra.mrb[0].mxu0 %v634
        %v755 = vpop.f32.mrb[0].mxu0
        %v756 = vadd.f32 %v667, %v755
        %v757 = vpop.f32.mrb[0].mxu0
        %758 = vmatprep.mubr.f32.mxu0 0.0
        %759 = vmatmul.mubr.f32.gmra.mrb[0].mxu0 %v635
        %v760 = vpop.f32.mrb[0].mxu0
        %v761 = vadd.f32 %v667, %v760
        %v762 = vpop.f32.mrb[0].mxu0
        %763 = vmatprep.mubr.f32.mxu0 0.0
        %764 = vmatmul.mubr.f32.gmra.mrb[0].mxu0 %v636
        %v765 = vpop.f32.mrb[0].mxu0
        %v766 = vadd.f32 %v667, %v765
        %v767 = vpop.f32.mrb[0].mxu0
        %768 = vmatprep.mubr.f32.mxu0 0.0
        %769 = vmatmul.mubr.f32.gmra.mrb[0].mxu0 %v637
        %v770 = vpop.f32.mrb[0].mxu0
        %v771 = vadd.f32 %v667, %v770
        %v772 = vpop.f32.mrb[0].mxu0
        %773 = vmatprep.mubr.f32.mxu0 0.0
        %774 = vmatmul.mubr.f32.gmra.mrb[0].mxu0 %v638
        %v775 = vpop.f32.mrb[0].mxu0
        %v776 = vadd.f32 %v667, %v775
        %v777 = vpop.f32.mrb[0].mxu0
        %778 = vmatprep.mubr.f32.mxu0 0.0
        %779 = vmatmul.mubr.f32.gmra.mrb[0].mxu0 %v639
        %v780 = vpop.f32.mrb[0].mxu0
        %v781 = vadd.f32 %v667, %v780
        %v782 = vpop.f32.mrb[0].mxu0
        %783 = vmatprep.mubr.f32.mxu0 0.0
        %784 = vmatmul.mubr.f32.gmra.mrb[0].mxu0 %v640
        %v785 = vpop.f32.mrb[0].mxu0
        %v786 = vadd.f32 %v667, %v785
        %v787 = vpop.f32.mrb[0].mxu0
        %788 = vmatprep.mubr.f32.mxu0 0.0
        %789 = vmatmul.mubr.f32.gmra.mrb[0].mxu0 %v641
        %v790 = vpop.f32.mrb[0].mxu0
        %v791 = vadd.f32 %v667, %v790
        %v792 = vpop.f32.mrb[0].mxu0
        %793 = vmatprep.mubr.f32.mxu0 0.0
        %794 = vmatmul.mubr.f32.gmra.mrb[0].mxu0 %v642
        %v795 = vpop.f32.mrb[0].mxu0
        %v796 = vadd.f32 %v667, %v795
        %v797 = vpop.f32.mrb[0].mxu0
        %798 = vmatprep.mubr.f32.mxu0 0.0
        %799 = vmatmul.mubr.f32.gmra.mrb[0].mxu0 %v643
        %v800 = vpop.f32.mrb[0].mxu0
        %v801 = vadd.f32 %v667, %v800
        %v802 = vpop.f32.mrb[0].mxu0
        %803 = vmatprep.mubr.f32.mxu0 0.0
        %804 = vmatmul.mubr.f32.gmra.mrb[0].mxu0 %v644
        %v805 = vpop.f32.mrb[0].mxu0
        %v806 = vadd.f32 %v667, %v805
        %v807 = vpop.f32.mrb[0].mxu0
        %808 = vmatprep.mubr.f32.mxu0 0.0
        %809 = vmatmul.mubr.f32.gmra.mrb[0].mxu0 %v645
        %v810 = vpop.f32.mrb[0].mxu0
        %v811 = vadd.f32 %v667, %v810
        %v812 = vpop.f32.mrb[0].mxu0
        %813 = vdwg.mxu0
        %v814 = vpack.c.bf16 %v741, %v736
        %v815 = vpack.c.bf16 %v751, %v746
        %v816 = vpack.c.bf16 %v761, %v756
        %v817 = vpack.c.bf16 %v771, %v766
        %v818 = vpack.c.bf16 %v781, %v776
        %v819 = vpack.c.bf16 %v791, %v786
        %v820 = vpack.c.bf16 %v801, %v796
        %v821 = vpack.c.bf16 %v811, %v806
        %v830 = vunpack.c.l.b16 %v814
        %v831 = vunpack.c.h.b16 %v814
        %v832 = vunpack.c.l.b16 %v815
        %v833 = vunpack.c.h.b16 %v815
        %v834 = vunpack.c.l.b16 %v816
        %v835 = vunpack.c.h.b16 %v816
        %v836 = vunpack.c.l.b16 %v817
        %v837 = vunpack.c.h.b16 %v817
        %v838 = vunpack.c.l.b16 %v818
        %v839 = vunpack.c.h.b16 %v818
        %v840 = vunpack.c.l.b16 %v819
        %v841 = vunpack.c.h.b16 %v819
        %v842 = vunpack.c.l.b16 %v820
        %v843 = vunpack.c.h.b16 %v820
        %v844 = vunpack.c.l.b16 %v821
        %v845 = vunpack.c.h.b16 %v821
        %v846 = vpack.c.b16 %v830, %v830
        %v847 = vpack.c.b16 %v831, %v831
        %v848 = vpack.c.b16 %v832, %v832
        %v849 = vpack.c.b16 %v833, %v833
        %v850 = vpack.c.b16 %v834, %v834
        %v851 = vpack.c.b16 %v835, %v835
        %v852 = vpack.c.b16 %v836, %v836
        %v853 = vpack.c.b16 %v837, %v837
        %v854 = vpack.c.b16 %v838, %v838
        %v855 = vpack.c.b16 %v839, %v839
        %v856 = vpack.c.b16 %v840, %v840
        %v857 = vpack.c.b16 %v841, %v841
        %v858 = vpack.c.b16 %v842, %v842
        %v859 = vpack.c.b16 %v843, %v843
        %v860 = vpack.c.b16 %v844, %v844
        %v861 = vpack.c.b16 %v845, %v845
        %878 = vst [vmem:[%s230] sm:$0xf] %v846
        %879 = vst [vmem:[%s230 + $0x4] sm:$0xf] %v847
        %880 = vst [vmem:[%s230 + $0x8] sm:$0xf] %v848
        %881 = vst [vmem:[%s230 + $0xc] sm:$0xf] %v849
        %882 = vst [vmem:[%s230 + $0x10] sm:$0xf] %v850
        %883 = vst [vmem:[%s230 + $0x14] sm:$0xf] %v851
        %884 = vst [vmem:[%s230 + $0x18] sm:$0xf] %v852
        %885 = vst [vmem:[%s230 + $0x1c] sm:$0xf] %v853
        %886 = vst [vmem:[%s230 + $0x20] sm:$0xf] %v854
        %887 = vst [vmem:[%s230 + $0x24] sm:$0xf] %v855
        %888 = vst [vmem:[%s230 + $0x28] sm:$0xf] %v856
        %889 = vst [vmem:[%s230 + $0x2c] sm:$0xf] %v857
        %890 = vst [vmem:[%s230 + $0x30] sm:$0xf] %v858
        %891 = vst [vmem:[%s230 + $0x34] sm:$0xf] %v859
        %892 = vst [vmem:[%s230 + $0x38] sm:$0xf] %v860
        %893 = vst [vmem:[%s230 + $0x3c] sm:$0xf] %v861
      $region44: #{gcn_v1_forward.4} parent=35 // pred_fallthru
        _
      %s894 = smul.u32 16, %s19
      %p895 = scmp.lt.s32.totalorder %s894, 31
      %s896 = scalar_select %p895, %s894, 31
      %s897 = smul.addr %s896, 4
      %s898 = scalar_lea.vmem %s4, %s897
      // Predicated region
      $region45: #{gcn_v1_forward.4} parent=35 // pred_check
        %p899 = pneg %p136
      $region46: #{gcn_v1_forward.4} parent=35 // pred_check_branch
        %901 = sbr.rel (%p899) target = $region48
      $region47: #{gcn_v1_forward.4} parent=35 // pred_region
        %s902 = smul.u32 16, %s19
      $region48: #{gcn_v1_forward.4} parent=35 // pred_fallthru
        _
    $region36: #{gcn_v1_forward.4} parent=5 // pred_fallthru
      _
    %p903 = scmp.le.s32.totalorder 2, %s10
    // Predicated region
    $region49: #{gcn_v1_forward.4} parent=5 // pred_check
      %p904 = pneg %p903
    $region50: #{gcn_v1_forward.4} parent=5 // pred_check_branch
      %906 = sbr.rel (%p904) target = $region52
    $region51: #{gcn_v1_forward.4} parent=5 // pred_region
      %s907 = ssub.s32 %s10, 2
      // Predicated region
      $region53: #{gcn_v1_forward.4} parent=51 // pred_check
        %p908 = pneg %p142
      $region54: #{gcn_v1_forward.4} parent=51 // pred_check_branch
        %910 = sbr.rel (%p908) target = $region56
      $region55: #{gcn_v1_forward.4} parent=51 // pred_region
        %s911 = smul.u32 16, %s21
        %p912 = scmp.lt.s32.totalorder %s911, 31
        %s913 = scalar_select %p912, %s911, 31
        %s914 = smul.addr %s913, 4
        %s915 = scalar_lea.vmem %s4, %s914
      $region56: #{gcn_v1_forward.4} parent=51 // pred_fallthru
        _
    $region52: #{gcn_v1_forward.4} parent=5 // pred_fallthru
      _
  $region6: #{gcn_v1_forward.4} parent=0 // loop_footer
    %s14 = sadd.s32 1, %s10
  $region7: #{gcn_v1_forward.4} parent=0 // loop_footer_branch
    %9 = sbr.rel target = $region3
  $region8: #{gcn_v1_forward.4} parent=0 // loop_exit
    _

// kernel: gcn_v1_forward.5
$region0: #{gcn_v1_forward.5}
  #allocation0 [shape = 'u32[]', space=smem, size = 0x4, offset = 0x4, fixed_abs, tag = 'smem constant byte address 0x4 - core index']
  #allocation1 [shape = 'u32[144,128]{1,0:T(1,128)}', space=vmem, size = 0x12000, scoped, tag = 'internal scratch']
  #allocation2 [shape = 'f32[128,128]{1,0:T(8,128)}', space=vmem, size = 0x10000, scoped, tag = 'scratch operand']
  %s0 = inlined_call_operand.vmem [shape: bf16[256,256], index: 0, kind: input, shape index: {}]
  %s1 = inlined_call_operand.vmem [shape: bf16[256,128], index: 1, kind: input, shape index: {}]
  %s2 = inlined_call_operand.vmem [shape: f32[128,128], index: 2, kind: input, shape index: {}]
  %s3 = inlined_call_operand.vmem [shape: f32[1,128], index: 3, kind: input, shape index: {}]
  %s4 = inlined_call_operand.hbm [shape: f32[256,128], index: 4, kind: output, shape index: {}]
  %s5 = sld [smem:[#allocation0]]
  $region57: #{gcn_v1_forward.5} parent=0
    _
  %s7 = ssub.s32 1, %s5
  %s8 = scalar_select 0, %s7, %s5
  $region1: #{gcn_v1_forward.5} parent=0
    #allocation3 [shape = 'u8[131072]{0}', space=vmem, size = 0x20000, scoped, tag = 'output window, operand 0']
    #allocation4 [shape = 's32[2]{0}', space=sflag, size = 0x8, scoped, tag = 'scoped memory for gcn_v1_forward.5']
    %9 = vsyncpa [#allocation4], 0
    %s10 = scalar_lea.sflag [#allocation4], 1
    %11 = vsyncpa %s10, 0
    loop: start=0, step=1, limit=4
    $region2: #{gcn_v1_forward.5} parent=1 // loop_pre_header
      _
    $region3: #{gcn_v1_forward.5} parent=1 // loop_header
      %s13 = sphi 0, %s17
      %p14 = scmp.ge.s32.totalorder %s13, 4
      %s20 = sphi 0, %s32
      %s21 = sphi 0, %s28
      %s22 = sphi 0, %s20
      %s23 = sphi 0, %s21
      %s24 = sphi 0, %s22
      %s25 = sphi 0, %s23
      %s37 = sphi 0, %s39
      %s40 = sphi 0, %s37
      %s41 = sphi 0, %s40
      %s57 = sphi 0, %s41
      %s61 = sphi 0, %s61
      %s63 = sphi 0, %s61
      %s64 = sphi 0, %s63
      %s78 = sphi 0, %s64
      %s82 = sphi 0, %s82
      %s84 = sphi 0, %s82
      %s85 = sphi 0, %s84
      %s99 = sphi 0, %s85
      %s103 = sphi 0, %s103
      %s105 = sphi 0, %s103
      %s106 = sphi 0, %s105
      %s120 = sphi 0, %s106
      %s126 = sphi 0, %s128
      %s129 = sphi 0, %s126
      %s130 = sphi 0, %s129
      %s146 = sphi 0, %s130
    $region4: #{gcn_v1_forward.5} parent=1 // loop_header_branch
      %16 = sbr.rel (%p14) target = $region8
    $region5: #{gcn_v1_forward.5} parent=1 // loop_body
      %s18 = ssub.s32 %s13, 1
      %s19 = ssub.s32 %s13, 2
      %s26 = sadd.s32 1, %s21
      %p27 = scmp.ge.s32.totalorder %s26, 1
      %s28 = scalar_select %p27, 0, %s26
      %s29 = sadd.s32 1, %s20
      %s30 = scalar_select %p27, %s29, %s20
      %p31 = scmp.ge.s32.totalorder %s30, 2
      %s32 = scalar_select %p31, 0, %s30
      %s33 = ssub.s32 %s20, %s32
      %s34 = ssub.s32 %s21, %s28
      %s35 = sor.u32 %s33, %s34
      %p36 = scmp.eq.s32.totalorder %s35, 0
      %s38 = sadd.s32 %s37, 1
      %s39 = scalar_select %p36, %s37, %s38
      %p42 = pneg %p36
      %p43 = scmp.eq.s32.totalorder %s13, 1
      %p44 = por %p42, %p43
      %p45 = scmp.ne.s32.totalorder %s37, %s40
      %p46 = scmp.eq.s32.totalorder %s13, 0
      %p47 = por %p45, %p46
      %p48 = scmp.ne.s32.totalorder %s37, %s40
      %p49 = scmp.eq.s32.totalorder %s18, 1
      %p50 = por %p48, %p49
      %p51 = scmp.ne.s32.totalorder %s40, %s41
      %p52 = scmp.eq.s32.totalorder %s18, 0
      %p53 = por %p51, %p52
      %p54 = scmp.ne.s32.totalorder %s40, %s41
      %p55 = scmp.eq.s32.totalorder %s19, 1
      %p56 = por %p54, %p55
      %p58 = scmp.ne.s32.totalorder %s41, %s57
      %p59 = scmp.eq.s32.totalorder %s19, 0
      %p60 = por %p58, %p59
      %s62 = sadd.s32 %s61, 1
      %p65 = scmp.eq.s32.totalorder %s13, 1
      %p66 = scmp.ne.s32.totalorder %s61, %s63
      %p67 = scmp.eq.s32.totalorder %s13, 0
      %p68 = por %p66, %p67
      %p69 = scmp.ne.s32.totalorder %s61, %s63
      %p70 = scmp.eq.s32.totalorder %s18, 1
      %p71 = por %p69, %p70
      %p72 = scmp.ne.s32.totalorder %s63, %s64
      %p73 = scmp.eq.s32.totalorder %s18, 0
      %p74 = por %p72, %p73
      %p75 = scmp.ne.s32.totalorder %s63, %s64
      %p76 = scmp.eq.s32.totalorder %s19, 1
      %p77 = por %p75, %p76
      %p79 = scmp.ne.s32.totalorder %s64, %s78
      %p80 = scmp.eq.s32.totalorder %s19, 0
      %p81 = por %p79, %p80
      %s83 = sadd.s32 %s82, 1
      %p86 = scmp.eq.s32.totalorder %s13, 1
      %p87 = scmp.ne.s32.totalorder %s82, %s84
      %p88 = scmp.eq.s32.totalorder %s13, 0
      %p89 = por %p87, %p88
      %p90 = scmp.ne.s32.totalorder %s82, %s84
      %p91 = scmp.eq.s32.totalorder %s18, 1
      %p92 = por %p90, %p91
      %p93 = scmp.ne.s32.totalorder %s84, %s85
      %p94 = scmp.eq.s32.totalorder %s18, 0
      %p95 = por %p93, %p94
      %p96 = scmp.ne.s32.totalorder %s84, %s85
      %p97 = scmp.eq.s32.totalorder %s19, 1
      %p98 = por %p96, %p97
      %p100 = scmp.ne.s32.totalorder %s85, %s99
      %p101 = scmp.eq.s32.totalorder %s19, 0
      %p102 = por %p100, %p101
      %s104 = sadd.s32 %s103, 1
      %p107 = scmp.eq.s32.totalorder %s13, 1
      %p108 = scmp.ne.s32.totalorder %s103, %s105
      %p109 = scmp.eq.s32.totalorder %s13, 0
      %p110 = por %p108, %p109
      %p111 = scmp.ne.s32.totalorder %s103, %s105
      %p112 = scmp.eq.s32.totalorder %s18, 1
      %p113 = por %p111, %p112
      %p114 = scmp.ne.s32.totalorder %s105, %s106
      %p115 = scmp.eq.s32.totalorder %s18, 0
      %p116 = por %p114, %p115
      %p117 = scmp.ne.s32.totalorder %s105, %s106
      %p118 = scmp.eq.s32.totalorder %s19, 1
      %p119 = por %p117, %p118
      %p121 = scmp.ne.s32.totalorder %s106, %s120
      %p122 = scmp.eq.s32.totalorder %s19, 0
      %p123 = por %p121, %p122
      %s124 = ssub.s32 %s20, %s32
      %p125 = scmp.eq.s32.totalorder %s124, 0
      %s127 = sadd.s32 %s126, 1
      %s128 = scalar_select %p125, %s126, %s127
      %p131 = pneg %p125
      %p132 = scmp.eq.s32.totalorder %s13, 1
      %p133 = por %p131, %p132
      %p134 = scmp.ne.s32.totalorder %s126, %s129
      %p135 = scmp.eq.s32.totalorder %s13, 0
      %p136 = por %p134, %p135
      %p137 = scmp.ne.s32.totalorder %s126, %s129
      %p138 = scmp.eq.s32.totalorder %s18, 1
      %p139 = por %p137, %p138
      %p140 = scmp.ne.s32.totalorder %s129, %s130
      %p141 = scmp.eq.s32.totalorder %s18, 0
      %p142 = por %p140, %p141
      %p143 = scmp.ne.s32.totalorder %s129, %s130
      %p144 = scmp.eq.s32.totalorder %s19, 1
      %p145 = por %p143, %p144
      %p147 = scmp.ne.s32.totalorder %s130, %s146
      %p148 = scmp.eq.s32.totalorder %s19, 0
      %p149 = por %p147, %p148
      %p150 = scmp.le.s32.totalorder 1, %s13
      %p151 = scmp.lt.s32.totalorder %s13, 3
      %p152 = pnand %p150, %p151
      %p153 = pneg %p152
      // Predicated region
      $region9: #{gcn_v1_forward.5} parent=5 // pred_check
        _
      $region10: #{gcn_v1_forward.5} parent=5 // pred_check_branch
        %155 = sbr.rel (%p152) target = $region12
      $region11: #{gcn_v1_forward.5} parent=5 // pred_region
        %s156 = ssub.s32 %s13, 1
        // Predicated region
        $region13: #{gcn_v1_forward.5} parent=11 // pred_check
          %p157 = pneg %p74
        $region14: #{gcn_v1_forward.5} parent=11 // pred_check_branch
          %159 = sbr.rel (%p157) target = $region16
        $region15: #{gcn_v1_forward.5} parent=11 // pred_region
          _
        $region16: #{gcn_v1_forward.5} parent=11 // pred_fallthru
          _
        // Predicated region
        $region17: #{gcn_v1_forward.5} parent=11 // pred_check
          %p160 = pneg %p95
        $region18: #{gcn_v1_forward.5} parent=11 // pred_check_branch
          %162 = sbr.rel (%p160) target = $region20
        $region19: #{gcn_v1_forward.5} parent=11 // pred_region
          _
        $region20: #{gcn_v1_forward.5} parent=11 // pred_fallthru
          _
        // Predicated region
        $region21: #{gcn_v1_forward.5} parent=11 // pred_check
          %p163 = pneg %p116
        $region22: #{gcn_v1_forward.5} parent=11 // pred_check_branch
          %165 = sbr.rel (%p163) target = $region24
        $region23: #{gcn_v1_forward.5} parent=11 // pred_region
          _
        $region24: #{gcn_v1_forward.5} parent=11 // pred_fallthru
          _
      $region12: #{gcn_v1_forward.5} parent=5 // pred_fallthru
        _
      %p166 = scmp.lt.s32.totalorder %s13, 2
      // Predicated region
      $region25: #{gcn_v1_forward.5} parent=5 // pred_check
        %p167 = pneg %p166
      $region26: #{gcn_v1_forward.5} parent=5 // pred_check_branch
        %169 = sbr.rel (%p167) target = $region28
      $region27: #{gcn_v1_forward.5} parent=5 // pred_region
        // Predicated region
        $region29: #{gcn_v1_forward.5} parent=27 // pred_check
          %p170 = pneg %p47
        $region30: #{gcn_v1_forward.5} parent=27 // pred_check_branch
          %172 = sbr.rel (%p170) target = $region32
        $region31: #{gcn_v1_forward.5} parent=27 // pred_region
          %s173 = smul.u32 16, %s20
          %s174 = smul.u32 2, %s21
          %p175 = scmp.lt.s32.totalorder %s173, 31
          %s176 = scalar_select %p175, %s173, 31
          %p177 = scmp.lt.s32.totalorder %s174, 1
          %s178 = scalar_select %p177, %s174, 1
          %s179 = smul.addr %s176, 2
          %s180 = sadd.s32 %s178, %s179
          %s181 = smul.addr %s180, 4
          %s182 = scalar_lea.vmem %s0, %s181
          %s183 = smul.u32 16, %s20
          %s184 = smul.u32 2, %s21
        $region32: #{gcn_v1_forward.5} parent=27 // pred_fallthru
          _
      $region28: #{gcn_v1_forward.5} parent=5 // pred_fallthru
        _
      %p185 = scmp.le.s32.totalorder 1, %s13
      %p186 = scmp.lt.s32.totalorder %s13, 3
      %p187 = pnand %p185, %p186
      %p188 = pneg %p187
      // Predicated region
      $region33: #{gcn_v1_forward.5} parent=5 // pred_check
        _
      $region34: #{gcn_v1_forward.5} parent=5 // pred_check_branch
        %190 = sbr.rel (%p187) target = $region36
      $region35: #{gcn_v1_forward.5} parent=5 // pred_region
        %s191 = ssub.s32 %s13, 1
        %s192 = smul.u32 16, %s22
        %s193 = smul.u32 2, %s23
        %p194 = scmp.lt.s32.totalorder %s192, 31
        %s195 = scalar_select %p194, %s192, 31
        %p196 = scmp.lt.s32.totalorder %s193, 1
        %s197 = scalar_select %p196, %s193, 1
        %s198 = smul.addr %s195, 2
        %s199 = sadd.s32 %s197, %s198
        %s200 = smul.addr %s199, 4
        %s201 = scalar_lea.vmem %s0, %s200
        %p202 = pneg %p53
        %p203 = pneg %p50
        %p204 = pneg %p74
        %p205 = pneg %p71
        %p206 = pneg %p95
        %p207 = pneg %p92
        %p208 = pneg %p116
        %p209 = pneg %p113
        %p210 = pneg %p142
        %p211 = pneg %p139
        %s212 = sand.u32 %s129, 1
        %s213 = scalar_lea.sflag [#allocation4], %s212
        %s214 = sand.u32 %s129, 1
        %s215 = smul.addr %s214, 128
        %s216 = scalar_lea.vmem [#allocation3], %s215
        %s217 = smul.u32 16, %s22
        %s218 = smul.u32 2, %s23
        %p219 = scmp.lt.s32.totalorder %s217, 31
        %s220 = scalar_select %p219, %s217, 31
        %p221 = scmp.lt.s32.totalorder %s218, 1
        %s222 = scalar_select %p221, %s218, 1
        %s223 = smul.addr %s220, 2
        %s224 = sadd.s32 %s222, %s223
        %s225 = smul.addr %s224, 4
        %s226 = scalar_lea.vmem %s0, %s225
        %s227 = smul.u32 16, %s22
        %s228 = smul.u32 2, %s23
        %s229 = smul.u32 16, %s22
        %p231 = scmp.eq.s32.totalorder %s23, 0
        // Predicated region
        $region37: #{gcn_v1_forward.5} parent=35 // pred_check
          %p232 = pneg %p231
        $region38: #{gcn_v1_forward.5} parent=35 // pred_check_branch
          %234 = sbr.rel (%p232) target = $region40
        $region39: #{gcn_v1_forward.5} parent=35 // pred_region
          %235 = vst [vmem:[#allocation2] sm:$0xff] 0.0
          %236 = vst [vmem:[#allocation2 + $0x8] sm:$0xff] 0.0
          %237 = vst [vmem:[#allocation2 + $0x10] sm:$0xff] 0.0
          %238 = vst [vmem:[#allocation2 + $0x18] sm:$0xff] 0.0
          %239 = vst [vmem:[#allocation2 + $0x20] sm:$0xff] 0.0
          %240 = vst [vmem:[#allocation2 + $0x28] sm:$0xff] 0.0
          %241 = vst [vmem:[#allocation2 + $0x30] sm:$0xff] 0.0
          %242 = vst [vmem:[#allocation2 + $0x38] sm:$0xff] 0.0
          %243 = vst [vmem:[#allocation2 + $0x40] sm:$0xff] 0.0
          %244 = vst [vmem:[#allocation2 + $0x48] sm:$0xff] 0.0
          %245 = vst [vmem:[#allocation2 + $0x50] sm:$0xff] 0.0
          %246 = vst [vmem:[#allocation2 + $0x58] sm:$0xff] 0.0
          %247 = vst [vmem:[#allocation2 + $0x60] sm:$0xff] 0.0
          %248 = vst [vmem:[#allocation2 + $0x68] sm:$0xff] 0.0
          %249 = vst [vmem:[#allocation2 + $0x70] sm:$0xff] 0.0
          %250 = vst [vmem:[#allocation2 + $0x78] sm:$0xff] 0.0
        $region40: #{gcn_v1_forward.5} parent=35 // pred_fallthru
          _
        %s251 = smul.u32 %s23, 256
        %s252 = sshra.s32 %s251, 3
        %s253 = sand.u32 %s251, 7
        %s254 = smul.addr %s252, 4
        %s255 = scalar_lea.vmem %s1, %s254
        %v256 = vld [vmem:[%s255] sm:$0xf]
        %v257 = vld [vmem:[%s255 + $0x4] sm:$0xf]
        %v258 = vld [vmem:[%s255 + $0x8] sm:$0xf]
        %v259 = vld [vmem:[%s255 + $0xc] sm:$0xf]
        %v260 = vld [vmem:[%s255 + $0x10] sm:$0xf]
        %v261 = vld [vmem:[%s255 + $0x14] sm:$0xf]
        %v262 = vld [vmem:[%s255 + $0x18] sm:$0xf]
        %v263 = vld [vmem:[%s255 + $0x1c] sm:$0xf]
        %v264 = vld [vmem:[%s255 + $0x20] sm:$0xf]
        %v265 = vld [vmem:[%s255 + $0x24] sm:$0xf]
        %v266 = vld [vmem:[%s255 + $0x28] sm:$0xf]
        %v267 = vld [vmem:[%s255 + $0x2c] sm:$0xf]
        %v268 = vld [vmem:[%s255 + $0x30] sm:$0xf]
        %v269 = vld [vmem:[%s255 + $0x34] sm:$0xf]
        %v270 = vld [vmem:[%s255 + $0x38] sm:$0xf]
        %v271 = vld [vmem:[%s255 + $0x3c] sm:$0xf]
        %v272 = vld [vmem:[%s255 + $0x40] sm:$0xf]
        %v273 = vld [vmem:[%s255 + $0x44] sm:$0xf]
        %v274 = vld [vmem:[%s255 + $0x48] sm:$0xf]
        %v275 = vld [vmem:[%s255 + $0x4c] sm:$0xf]
        %v276 = vld [vmem:[%s255 + $0x50] sm:$0xf]
        %v277 = vld [vmem:[%s255 + $0x54] sm:$0xf]
        %v278 = vld [vmem:[%s255 + $0x58] sm:$0xf]
        %v279 = vld [vmem:[%s255 + $0x5c] sm:$0xf]
        %v280 = vld [vmem:[%s255 + $0x60] sm:$0xf]
        %v281 = vld [vmem:[%s255 + $0x64] sm:$0xf]
        %v282 = vld [vmem:[%s255 + $0x68] sm:$0xf]
        %v283 = vld [vmem:[%s255 + $0x6c] sm:$0xf]
        %v284 = vld [vmem:[%s255 + $0x70] sm:$0xf]
        %v285 = vld [vmem:[%s255 + $0x74] sm:$0xf]
        %v286 = vld [vmem:[%s255 + $0x78] sm:$0xf]
        %v287 = vld [vmem:[%s255 + $0x7c] sm:$0xf]
        %v288 = vld [vmem:[#allocation2] sm:$0xff]
        %v289 = vld [vmem:[#allocation2 + $0x8] sm:$0xff]
        %v290 = vld [vmem:[#allocation2 + $0x10] sm:$0xff]
        %v291 = vld [vmem:[#allocation2 + $0x18] sm:$0xff]
        %v292 = vld [vmem:[#allocation2 + $0x20] sm:$0xff]
        %v293 = vld [vmem:[#allocation2 + $0x28] sm:$0xff]
        %v294 = vld [vmem:[#allocation2 + $0x30] sm:$0xff]
        %v295 = vld [vmem:[#allocation2 + $0x38] sm:$0xff]
        %v296 = vld [vmem:[#allocation2 + $0x40] sm:$0xff]
        %v297 = vld [vmem:[#allocation2 + $0x48] sm:$0xff]
        %v298 = vld [vmem:[#allocation2 + $0x50] sm:$0xff]
        %v299 = vld [vmem:[#allocation2 + $0x58] sm:$0xff]
        %v300 = vld [vmem:[#allocation2 + $0x60] sm:$0xff]
        %v301 = vld [vmem:[#allocation2 + $0x68] sm:$0xff]
        %v302 = vld [vmem:[#allocation2 + $0x70] sm:$0xff]
        %v303 = vld [vmem:[#allocation2 + $0x78] sm:$0xff]
        %v304 = vld [vmem:[%s226] sm:$0xff]
        %v305 = vld [vmem:[%s226 + $0x8] sm:$0xff]
        %v306 = vld [vmem:[%s226 + $0x10] sm:$0xff]
        %v307 = vld [vmem:[%s226 + $0x18] sm:$0xff]
        %v308 = vld [vmem:[%s226 + $0x20] sm:$0xff]
        %v309 = vld [vmem:[%s226 + $0x28] sm:$0xff]
        %v310 = vld [vmem:[%s226 + $0x30] sm:$0xff]
        %v311 = vld [vmem:[%s226 + $0x38] sm:$0xff]
        %v312 = vld [vmem:[%s226 + $0x40] sm:$0xff]
        %v313 = vld [vmem:[%s226 + $0x48] sm:$0xff]
        %v314 = vld [vmem:[%s226 + $0x50] sm:$0xff]
        %v315 = vld [vmem:[%s226 + $0x58] sm:$0xff]
        %v316 = vld [vmem:[%s226 + $0x60] sm:$0xff]
        %v317 = vld [vmem:[%s226 + $0x68] sm:$0xff]
        %v318 = vld [vmem:[%s226 + $0x70] sm:$0xff]
        %v319 = vld [vmem:[%s226 + $0x78] sm:$0xff]
        %v336 = vunpack.c.l.b16 %v304
        %v337 = vunpack.c.h.b16 %v304
        %v338 = vunpack.c.l.b16 %v305
        %v339 = vunpack.c.h.b16 %v305
        %v340 = vunpack.c.l.b16 %v306
        %v341 = vunpack.c.h.b16 %v306
        %v342 = vunpack.c.l.b16 %v307
        %v343 = vunpack.c.h.b16 %v307
        %v344 = vunpack.c.l.b16 %v308
        %v345 = vunpack.c.h.b16 %v308
        %v346 = vunpack.c.l.b16 %v309
        %v347 = vunpack.c.h.b16 %v309
        %v348 = vunpack.c.l.b16 %v310
        %v349 = vunpack.c.h.b16 %v310
        %v350 = vunpack.c.l.b16 %v311
        %v351 = vunpack.c.h.b16 %v311
        %v352 = vunpack.c.l.b16 %v312
        %v353 = vunpack.c.h.b16 %v312
        %v354 = vunpack.c.l.b16 %v313
        %v355 = vunpack.c.h.b16 %v313
        %v356 = vunpack.c.l.b16 %v314
        %v357 = vunpack.c.h.b16 %v314
        %v358 = vunpack.c.l.b16 %v315
        %v359 = vunpack.c.h.b16 %v315
        %v360 = vunpack.c.l.b16 %v316
        %v361 = vunpack.c.h.b16 %v316
        %v362 = vunpack.c.l.b16 %v317
        %v363 = vunpack.c.h.b16 %v317
        %v364 = vunpack.c.l.b16 %v318
        %v365 = vunpack.c.h.b16 %v318
        %v366 = vunpack.c.l.b16 %v319
        %v367 = vunpack.c.h.b16 %v319
        %v368 = vpack.c.b16 %v338, %v336
        %v369 = vpack.c.b16 %v339, %v337
        %v370 = vpack.c.b16 %v342, %v340
        %v371 = vpack.c.b16 %v343, %v341
        %v372 = vpack.c.b16 %v346, %v344
        %v373 = vpack.c.b16 %v347, %v345
        %v374 = vpack.c.b16 %v350, %v348
        %v375 = vpack.c.b16 %v351, %v349
        %v376 = vpack.c.b16 %v354, %v352
        %v377 = vpack.c.b16 %v355, %v353
        %v378 = vpack.c.b16 %v358, %v356
        %v379 = vpack.c.b16 %v359, %v357
        %v380 = vpack.c.b16 %v362, %v360
        %v381 = vpack.c.b16 %v363, %v361
        %v382 = vpack.c.b16 %v366, %v364
        %v383 = vpack.c.b16 %v367, %v365
        %v432 = vunpack.c.l.b16 %v256
        %v433 = vunpack.c.l.b16 %v257
        %v434 = vunpack.c.l.b16 %v258
        %v435 = vunpack.c.l.b16 %v259
        %v436 = vunpack.c.l.b16 %v260
        %v437 = vunpack.c.l.b16 %v261
        %v438 = vunpack.c.l.b16 %v262
        %v439 = vunpack.c.l.b16 %v263
        %v440 = vunpack.c.l.b16 %v264
        %v441 = vunpack.c.l.b16 %v265
        %v442 = vunpack.c.l.b16 %v266
        %v443 = vunpack.c.l.b16 %v267
        %v444 = vunpack.c.l.b16 %v268
        %v445 = vunpack.c.l.b16 %v269
        %v446 = vunpack.c.l.b16 %v270
        %v447 = vunpack.c.l.b16 %v271
        %v448 = vunpack.c.l.b16 %v272
        %v449 = vunpack.c.l.b16 %v273
        %v450 = vunpack.c.l.b16 %v274
        %v451 = vunpack.c.l.b16 %v275
        %v452 = vunpack.c.l.b16 %v276
        %v453 = vunpack.c.l.b16 %v277
        %v454 = vunpack.c.l.b16 %v278
        %v455 = vunpack.c.l.b16 %v279
        %v456 = vunpack.c.l.b16 %v280
        %v457 = vunpack.c.l.b16 %v281
        %v458 = vunpack.c.l.b16 %v282
        %v459 = vunpack.c.l.b16 %v283
        %v460 = vunpack.c.l.b16 %v284
        %v461 = vunpack.c.l.b16 %v285
        %v462 = vunpack.c.l.b16 %v286
        %v463 = vunpack.c.l.b16 %v287
        %v464 = vpack.c.b16 %v433, %v432
        %v465 = vpack.c.b16 %v435, %v434
        %v466 = vpack.c.b16 %v437, %v436
        %v467 = vpack.c.b16 %v439, %v438
        %v468 = vpack.c.b16 %v441, %v440
        %v469 = vpack.c.b16 %v443, %v442
        %v470 = vpack.c.b16 %v445, %v444
        %v471 = vpack.c.b16 %v447, %v446
        %v472 = vpack.c.b16 %v449, %v448
        %v473 = vpack.c.b16 %v451, %v450
        %v474 = vpack.c.b16 %v453, %v452
        %v475 = vpack.c.b16 %v455, %v454
        %v476 = vpack.c.b16 %v457, %v456
        %v477 = vpack.c.b16 %v459, %v458
        %v478 = vpack.c.b16 %v461, %v460
        %v479 = vpack.c.b16 %v463, %v462
        %496 = vmatprep.subr.bf16.mxu0 0
        %497 = vmatpush1.bf16.msra.mxu0 %v464
        %498 = vmatprep.subr.bf16.mxu0 0
        %499 = vmatpush1.bf16.msra.mxu0 %v465
        %500 = vmatprep.subr.bf16.mxu0 0
        %501 = vmatpush1.bf16.msra.mxu0 %v466
        %502 = vmatprep.subr.bf16.mxu0 0
        %503 = vmatpush1.bf16.msra.mxu0 %v467
        %504 = vmatprep.subr.bf16.mxu0 0
        %505 = vmatpush1.bf16.msra.mxu0 %v468
        %506 = vmatprep.subr.bf16.mxu0 0
        %507 = vmatpush1.bf16.msra.mxu0 %v469
        %508 = vmatprep.subr.bf16.mxu0 0
        %509 = vmatpush1.bf16.msra.mxu0 %v470
        %510 = vmatprep.subr.bf16.mxu0 0
        %511 = vmatpush1.bf16.msra.mxu0 %v471
        %512 = vmatprep.subr.bf16.mxu0 0
        %513 = vmatpush1.bf16.msra.mxu0 %v472
        %514 = vmatprep.subr.bf16.mxu0 0
        %515 = vmatpush1.bf16.msra.mxu0 %v473
        %516 = vmatprep.subr.bf16.mxu0 0
        %517 = vmatpush1.bf16.msra.mxu0 %v474
        %518 = vmatprep.subr.bf16.mxu0 0
        %519 = vmatpush1.bf16.msra.mxu0 %v475
        %520 = vmatprep.subr.bf16.mxu0 0
        %521 = vmatpush1.bf16.msra.mxu0 %v476
        %522 = vmatprep.subr.bf16.mxu0 0
        %523 = vmatpush1.bf16.msra.mxu0 %v477
        %524 = vmatprep.subr.bf16.mxu0 0
        %525 = vmatpush1.bf16.msra.mxu0 %v478
        %526 = vmatprep.subr.bf16.mxu0 0
        %527 = vmatpush1.bf16.msra.mxu0 %v479
        %528 = vmatprep.mubr.bf16.mxu0 %v369
        %529 = vmatmul.mubr.bf16.gmra.mrb[0].mxu0 %v368
        %v530 = vpop.f32.mrb[0].mxu0
        %v531 = vadd.f32 0.0, %v530
        %v532 = vpop.f32.mrb[0].mxu0
        %v533 = vpop.f32.mrb[0].mxu0
        %v534 = vadd.f32 0.0, %v533
        %v535 = vpop.f32.mrb[0].mxu0
        %536 = vmatprep.mubr.bf16.mxu0 %v371
        %537 = vmatmul.mubr.bf16.gmra.mrb[0].mxu0 %v370
        %v538 = vpop.f32.mrb[0].mxu0
        %v539 = vadd.f32 0.0, %v538
        %v540 = vpop.f32.mrb[0].mxu0
        %v541 = vpop.f32.mrb[0].mxu0
        %v542 = vadd.f32 0.0, %v541
        %v543 = vpop.f32.mrb[0].mxu0
        %544 = vmatprep.mubr.bf16.mxu0 %v373
        %545 = vmatmul.mubr.bf16.gmra.mrb[0].mxu0 %v372
        %v546 = vpop.f32.mrb[0].mxu0
        %v547 = vadd.f32 0.0, %v546
        %v548 = vpop.f32.mrb[0].mxu0
        %v549 = vpop.f32.mrb[0].mxu0
        %v550 = vadd.f32 0.0, %v549
        %v551 = vpop.f32.mrb[0].mxu0
        %552 = vmatprep.mubr.bf16.mxu0 %v375
        %553 = vmatmul.mubr.bf16.gmra.mrb[0].mxu0 %v374
        %v554 = vpop.f32.mrb[0].mxu0
        %v555 = vadd.f32 0.0, %v554
        %v556 = vpop.f32.mrb[0].mxu0
        %v557 = vpop.f32.mrb[0].mxu0
        %v558 = vadd.f32 0.0, %v557
        %v559 = vpop.f32.mrb[0].mxu0
        %560 = vmatprep.mubr.bf16.mxu0 %v377
        %561 = vmatmul.mubr.bf16.gmra.mrb[0].mxu0 %v376
        %v562 = vpop.f32.mrb[0].mxu0
        %v563 = vadd.f32 0.0, %v562
        %v564 = vpop.f32.mrb[0].mxu0
        %v565 = vpop.f32.mrb[0].mxu0
        %v566 = vadd.f32 0.0, %v565
        %v567 = vpop.f32.mrb[0].mxu0
        %568 = vmatprep.mubr.bf16.mxu0 %v379
        %569 = vmatmul.mubr.bf16.gmra.mrb[0].mxu0 %v378
        %v570 = vpop.f32.mrb[0].mxu0
        %v571 = vadd.f32 0.0, %v570
        %v572 = vpop.f32.mrb[0].mxu0
        %v573 = vpop.f32.mrb[0].mxu0
        %v574 = vadd.f32 0.0, %v573
        %v575 = vpop.f32.mrb[0].mxu0
        %576 = vmatprep.mubr.bf16.mxu0 %v381
        %577 = vmatmul.mubr.bf16.gmra.mrb[0].mxu0 %v380
        %v578 = vpop.f32.mrb[0].mxu0
        %v579 = vadd.f32 0.0, %v578
        %v580 = vpop.f32.mrb[0].mxu0
        %v581 = vpop.f32.mrb[0].mxu0
        %v582 = vadd.f32 0.0, %v581
        %v583 = vpop.f32.mrb[0].mxu0
        %584 = vmatprep.mubr.bf16.mxu0 %v383
        %585 = vmatmul.mubr.bf16.gmra.mrb[0].mxu0 %v382
        %v586 = vpop.f32.mrb[0].mxu0
        %v587 = vadd.f32 0.0, %v586
        %v588 = vpop.f32.mrb[0].mxu0
        %v589 = vpop.f32.mrb[0].mxu0
        %v590 = vadd.f32 0.0, %v589
        %v591 = vpop.f32.mrb[0].mxu0
        %592 = vdwg.mxu0
        %v593 = vadd.f32 %v288, %v531
        %v594 = vadd.f32 %v289, %v534
        %v595 = vadd.f32 %v290, %v539
        %v596 = vadd.f32 %v291, %v542
        %v597 = vadd.f32 %v292, %v547
        %v598 = vadd.f32 %v293, %v550
        %v599 = vadd.f32 %v294, %v555
        %v600 = vadd.f32 %v295, %v558
        %v601 = vadd.f32 %v296, %v563
        %v602 = vadd.f32 %v297, %v566
        %v603 = vadd.f32 %v298, %v571
        %v604 = vadd.f32 %v299, %v574
        %v605 = vadd.f32 %v300, %v579
        %v606 = vadd.f32 %v301, %v582
        %v607 = vadd.f32 %v302, %v587
        %v608 = vadd.f32 %v303, %v590
        %609 = vst [vmem:[#allocation2] sm:$0xff] %v593
        %610 = vst [vmem:[#allocation2 + $0x8] sm:$0xff] %v594
        %611 = vst [vmem:[#allocation2 + $0x10] sm:$0xff] %v595
        %612 = vst [vmem:[#allocation2 + $0x18] sm:$0xff] %v596
        %613 = vst [vmem:[#allocation2 + $0x20] sm:$0xff] %v597
        %614 = vst [vmem:[#allocation2 + $0x28] sm:$0xff] %v598
        %615 = vst [vmem:[#allocation2 + $0x30] sm:$0xff] %v599
        %616 = vst [vmem:[#allocation2 + $0x38] sm:$0xff] %v600
        %617 = vst [vmem:[#allocation2 + $0x40] sm:$0xff] %v601
        %618 = vst [vmem:[#allocation2 + $0x48] sm:$0xff] %v602
        %619 = vst [vmem:[#allocation2 + $0x50] sm:$0xff] %v603
        %620 = vst [vmem:[#allocation2 + $0x58] sm:$0xff] %v604
        %621 = vst [vmem:[#allocation2 + $0x60] sm:$0xff] %v605
        %622 = vst [vmem:[#allocation2 + $0x68] sm:$0xff] %v606
        %623 = vst [vmem:[#allocation2 + $0x70] sm:$0xff] %v607
        %624 = vst [vmem:[#allocation2 + $0x78] sm:$0xff] %v608
        // Predicated region
        $region41: #{gcn_v1_forward.5} parent=35 // pred_check
          %p625 = pneg %p231
        $region42: #{gcn_v1_forward.5} parent=35 // pred_check_branch
          %627 = sbr.rel (%p625) target = $region44
        $region43: #{gcn_v1_forward.5} parent=35 // pred_region
          %v628 = vld [vmem:[#allocation2] sm:$0xff]
          %v629 = vld [vmem:[#allocation2 + $0x8] sm:$0xff]
          %v630 = vld [vmem:[#allocation2 + $0x10] sm:$0xff]
          %v631 = vld [vmem:[#allocation2 + $0x18] sm:$0xff]
          %v632 = vld [vmem:[#allocation2 + $0x20] sm:$0xff]
          %v633 = vld [vmem:[#allocation2 + $0x28] sm:$0xff]
          %v634 = vld [vmem:[#allocation2 + $0x30] sm:$0xff]
          %v635 = vld [vmem:[#allocation2 + $0x38] sm:$0xff]
          %v636 = vld [vmem:[#allocation2 + $0x40] sm:$0xff]
          %v637 = vld [vmem:[#allocation2 + $0x48] sm:$0xff]
          %v638 = vld [vmem:[#allocation2 + $0x50] sm:$0xff]
          %v639 = vld [vmem:[#allocation2 + $0x58] sm:$0xff]
          %v640 = vld [vmem:[#allocation2 + $0x60] sm:$0xff]
          %v641 = vld [vmem:[#allocation2 + $0x68] sm:$0xff]
          %v642 = vld [vmem:[#allocation2 + $0x70] sm:$0xff]
          %v643 = vld [vmem:[#allocation2 + $0x78] sm:$0xff]
          %v644 = vld [vmem:[%s2] sm:$0xff]
          %v645 = vld [vmem:[%s2 + $0x8] sm:$0xff]
          %v646 = vld [vmem:[%s2 + $0x10] sm:$0xff]
          %v647 = vld [vmem:[%s2 + $0x18] sm:$0xff]
          %v648 = vld [vmem:[%s2 + $0x20] sm:$0xff]
          %v649 = vld [vmem:[%s2 + $0x28] sm:$0xff]
          %v650 = vld [vmem:[%s2 + $0x30] sm:$0xff]
          %v651 = vld [vmem:[%s2 + $0x38] sm:$0xff]
          %v652 = vld [vmem:[%s2 + $0x40] sm:$0xff]
          %v653 = vld [vmem:[%s2 + $0x48] sm:$0xff]
          %v654 = vld [vmem:[%s2 + $0x50] sm:$0xff]
          %v655 = vld [vmem:[%s2 + $0x58] sm:$0xff]
          %v656 = vld [vmem:[%s2 + $0x60] sm:$0xff]
          %v657 = vld [vmem:[%s2 + $0x68] sm:$0xff]
          %v658 = vld [vmem:[%s2 + $0x70] sm:$0xff]
          %v659 = vld [vmem:[%s2 + $0x78] sm:$0xff]
          %v660 = vld [vmem:[%s3] sm:$0x1]
          %v662 = vlaneseq
          %v663 = vshrl.u32 %v662, 7
          %v664 = vsub.s32 0, %v663
          %v665 = vrot.slane %v660, %v664
          %667 = vmatprep.subr.mxu0 0.0
          %668 = vmatpush1.msra.mxu0 %v644
          %669 = vmatprep.subr.mxu0 0.0
          %670 = vmatpush1.msra.mxu0 %v645
          %671 = vmatprep.subr.mxu0 0.0
          %672 = vmatpush1.msra.mxu0 %v646
          %673 = vmatprep.subr.mxu0 0.0
          %674 = vmatpush1.msra.mxu0 %v647
          %675 = vmatprep.subr.mxu0 0.0
          %676 = vmatpush1.msra.mxu0 %v648
          %677 = vmatprep.subr.mxu0 0.0
          %678 = vmatpush1.msra.mxu0 %v649
          %679 = vmatprep.subr.mxu0 0.0
          %680 = vmatpush1.msra.mxu0 %v650
          %681 = vmatprep.subr.mxu0 0.0
          %682 = vmatpush1.msra.mxu0 %v651
          %683 = vmatprep.subr.mxu0 0.0
          %684 = vmatpush1.msra.mxu0 %v652
          %685 = vmatprep.subr.mxu0 0.0
          %686 = vmatpush1.msra.mxu0 %v653
          %687 = vmatprep.subr.mxu0 0.0
          %688 = vmatpush1.msra.mxu0 %v654
          %689 = vmatprep.subr.mxu0 0.0
          %690 = vmatpush1.msra.mxu0 %v655
          %691 = vmatprep.subr.mxu0 0.0
          %692 = vmatpush1.msra.mxu0 %v656
          %693 = vmatprep.subr.mxu0 0.0
          %694 = vmatpush1.msra.mxu0 %v657
          %695 = vmatprep.subr.mxu0 0.0
          %696 = vmatpush1.msra.mxu0 %v658
          %697 = vmatprep.subr.mxu0 0.0
          %698 = vmatpush1.msra.mxu0 %v659
          %699 = vmatprep.subr.mxu0 0.0
          %700 = vmatpush1.msra.mxu0 0.0
          %701 = vmatprep.subr.mxu0 0.0
          %702 = vmatpush1.msra.mxu0 0.0
          %703 = vmatprep.subr.mxu0 0.0
          %704 = vmatpush1.msra.mxu0 0.0
          %705 = vmatprep.subr.mxu0 0.0
          %706 = vmatpush1.msra.mxu0 0.0
          %707 = vmatprep.subr.mxu0 0.0
          %708 = vmatpush1.msra.mxu0 0.0
          %709 = vmatprep.subr.mxu0 0.0
          %710 = vmatpush1.msra.mxu0 0.0
          %711 = vmatprep.subr.mxu0 0.0
          %712 = vmatpush1.msra.mxu0 0.0
          %713 = vmatprep.subr.mxu0 0.0
          %714 = vmatpush1.msra.mxu0 0.0
          %715 = vmatprep.subr.mxu0 0.0
          %716 = vmatpush1.msra.mxu0 0.0
          %717 = vmatprep.subr.mxu0 0.0
          %718 = vmatpush1.msra.mxu0 0.0
          %719 = vmatprep.subr.mxu0 0.0
          %720 = vmatpush1.msra.mxu0 0.0
          %721 = vmatprep.subr.mxu0 0.0
          %722 = vmatpush1.msra.mxu0 0.0
          %723 = vmatprep.subr.mxu0 0.0
          %724 = vmatpush1.msra.mxu0 0.0
          %725 = vmatprep.subr.mxu0 0.0
          %726 = vmatpush1.msra.mxu0 0.0
          %727 = vmatprep.subr.mxu0 0.0
          %728 = vmatpush1.msra.mxu0 0.0
          %729 = vmatprep.subr.mxu0 0.0
          %730 = vmatpush1.msra.mxu0 0.0
          %731 = vmatprep.mubr.f32.mxu0 0.0
          %732 = vmatmul.mubr.f32.gmra.mrb[0].mxu0 %v628
          %v733 = vpop.f32.mrb[0].mxu0
          %v734 = vadd.f32 %v665, %v733
          %v735 = vpop.f32.mrb[0].mxu0
          %736 = vmatprep.mubr.f32.mxu0 0.0
          %737 = vmatmul.mubr.f32.gmra.mrb[0].mxu0 %v629
          %v738 = vpop.f32.mrb[0].mxu0
          %v739 = vadd.f32 %v665, %v738
          %v740 = vpop.f32.mrb[0].mxu0
          %741 = vmatprep.mubr.f32.mxu0 0.0
          %742 = vmatmul.mubr.f32.gmra.mrb[0].mxu0 %v630
          %v743 = vpop.f32.mrb[0].mxu0
          %v744 = vadd.f32 %v665, %v743
          %v745 = vpop.f32.mrb[0].mxu0
          %746 = vmatprep.mubr.f32.mxu0 0.0
          %747 = vmatmul.mubr.f32.gmra.mrb[0].mxu0 %v631
          %v748 = vpop.f32.mrb[0].mxu0
          %v749 = vadd.f32 %v665, %v748
          %v750 = vpop.f32.mrb[0].mxu0
          %751 = vmatprep.mubr.f32.mxu0 0.0
          %752 = vmatmul.mubr.f32.gmra.mrb[0].mxu0 %v632
          %v753 = vpop.f32.mrb[0].mxu0
          %v754 = vadd.f32 %v665, %v753
          %v755 = vpop.f32.mrb[0].mxu0
          %756 = vmatprep.mubr.f32.mxu0 0.0
          %757 = vmatmul.mubr.f32.gmra.mrb[0].mxu0 %v633
          %v758 = vpop.f32.mrb[0].mxu0
          %v759 = vadd.f32 %v665, %v758
          %v760 = vpop.f32.mrb[0].mxu0
          %761 = vmatprep.mubr.f32.mxu0 0.0
          %762 = vmatmul.mubr.f32.gmra.mrb[0].mxu0 %v634
          %v763 = vpop.f32.mrb[0].mxu0
          %v764 = vadd.f32 %v665, %v763
          %v765 = vpop.f32.mrb[0].mxu0
          %766 = vmatprep.mubr.f32.mxu0 0.0
          %767 = vmatmul.mubr.f32.gmra.mrb[0].mxu0 %v635
          %v768 = vpop.f32.mrb[0].mxu0
          %v769 = vadd.f32 %v665, %v768
          %v770 = vpop.f32.mrb[0].mxu0
          %771 = vmatprep.mubr.f32.mxu0 0.0
          %772 = vmatmul.mubr.f32.gmra.mrb[0].mxu0 %v636
          %v773 = vpop.f32.mrb[0].mxu0
          %v774 = vadd.f32 %v665, %v773
          %v775 = vpop.f32.mrb[0].mxu0
          %776 = vmatprep.mubr.f32.mxu0 0.0
          %777 = vmatmul.mubr.f32.gmra.mrb[0].mxu0 %v637
          %v778 = vpop.f32.mrb[0].mxu0
          %v779 = vadd.f32 %v665, %v778
          %v780 = vpop.f32.mrb[0].mxu0
          %781 = vmatprep.mubr.f32.mxu0 0.0
          %782 = vmatmul.mubr.f32.gmra.mrb[0].mxu0 %v638
          %v783 = vpop.f32.mrb[0].mxu0
          %v784 = vadd.f32 %v665, %v783
          %v785 = vpop.f32.mrb[0].mxu0
          %786 = vmatprep.mubr.f32.mxu0 0.0
          %787 = vmatmul.mubr.f32.gmra.mrb[0].mxu0 %v639
          %v788 = vpop.f32.mrb[0].mxu0
          %v789 = vadd.f32 %v665, %v788
          %v790 = vpop.f32.mrb[0].mxu0
          %791 = vmatprep.mubr.f32.mxu0 0.0
          %792 = vmatmul.mubr.f32.gmra.mrb[0].mxu0 %v640
          %v793 = vpop.f32.mrb[0].mxu0
          %v794 = vadd.f32 %v665, %v793
          %v795 = vpop.f32.mrb[0].mxu0
          %796 = vmatprep.mubr.f32.mxu0 0.0
          %797 = vmatmul.mubr.f32.gmra.mrb[0].mxu0 %v641
          %v798 = vpop.f32.mrb[0].mxu0
          %v799 = vadd.f32 %v665, %v798
          %v800 = vpop.f32.mrb[0].mxu0
          %801 = vmatprep.mubr.f32.mxu0 0.0
          %802 = vmatmul.mubr.f32.gmra.mrb[0].mxu0 %v642
          %v803 = vpop.f32.mrb[0].mxu0
          %v804 = vadd.f32 %v665, %v803
          %v805 = vpop.f32.mrb[0].mxu0
          %806 = vmatprep.mubr.f32.mxu0 0.0
          %807 = vmatmul.mubr.f32.gmra.mrb[0].mxu0 %v643
          %v808 = vpop.f32.mrb[0].mxu0
          %v809 = vadd.f32 %v665, %v808
          %v810 = vpop.f32.mrb[0].mxu0
          %811 = vdwg.mxu0
          %812 = vst [vmem:[%s216] sm:$0xff] %v734
          %813 = vst [vmem:[%s216 + $0x8] sm:$0xff] %v739
          %814 = vst [vmem:[%s216 + $0x10] sm:$0xff] %v744
          %815 = vst [vmem:[%s216 + $0x18] sm:$0xff] %v749
          %816 = vst [vmem:[%s216 + $0x20] sm:$0xff] %v754
          %817 = vst [vmem:[%s216 + $0x28] sm:$0xff] %v759
          %818 = vst [vmem:[%s216 + $0x30] sm:$0xff] %v764
          %819 = vst [vmem:[%s216 + $0x38] sm:$0xff] %v769
          %820 = vst [vmem:[%s216 + $0x40] sm:$0xff] %v774
          %821 = vst [vmem:[%s216 + $0x48] sm:$0xff] %v779
          %822 = vst [vmem:[%s216 + $0x50] sm:$0xff] %v784
          %823 = vst [vmem:[%s216 + $0x58] sm:$0xff] %v789
          %824 = vst [vmem:[%s216 + $0x60] sm:$0xff] %v794
          %825 = vst [vmem:[%s216 + $0x68] sm:$0xff] %v799
          %826 = vst [vmem:[%s216 + $0x70] sm:$0xff] %v804
          %827 = vst [vmem:[%s216 + $0x78] sm:$0xff] %v809
        $region44: #{gcn_v1_forward.5} parent=35 // pred_fallthru
          _
        %s828 = sand.u32 %s129, 1
        %s829 = scalar_lea.sflag [#allocation4], %s828
        %s830 = sand.u32 %s129, 1
        %s831 = smul.addr %s830, 128
        %s832 = scalar_lea.vmem [#allocation3], %s831
        // Predicated region
        $region45: #{gcn_v1_forward.5} parent=35 // pred_check
          %p833 = pneg %p139
        $region46: #{gcn_v1_forward.5} parent=35 // pred_check_branch
          %835 = sbr.rel (%p833) target = $region48
        $region47: #{gcn_v1_forward.5} parent=35 // pred_region
          %s836 = smul.u32 16, %s22
          %s838 = ssub.s32 2048, 2048
          %839 = vsyncadd %s829, %s838
          %s840 = smul.addr %s836, 128
          %s841 = scalar_lea.hbm %s4, %s840
          %s842 = sshll.u32 %s832, 4
          %s843 = int_to_ptr.vmem [resolvable:$true] %s842
          %848 = dma.vmem_to_hbm [thread:$0]  %s843, 2048, %s841, %s829, 128, 128, 8
        $region48: #{gcn_v1_forward.5} parent=35 // pred_fallthru
          _
      $region36: #{gcn_v1_forward.5} parent=5 // pred_fallthru
        _
      %p849 = scmp.le.s32.totalorder 2, %s13
      // Predicated region
      $region49: #{gcn_v1_forward.5} parent=5 // pred_check
        %p850 = pneg %p849
      $region50: #{gcn_v1_forward.5} parent=5 // pred_check_branch
        %852 = sbr.rel (%p850) target = $region52
      $region51: #{gcn_v1_forward.5} parent=5 // pred_region
        %s853 = ssub.s32 %s13, 2
        // Predicated region
        $region53: #{gcn_v1_forward.5} parent=51 // pred_check
          %p854 = pneg %p145
        $region54: #{gcn_v1_forward.5} parent=51 // pred_check_branch
          %856 = sbr.rel (%p854) target = $region56
        $region55: #{gcn_v1_forward.5} parent=51 // pred_region
          %s857 = sand.u32 %s130, 1
          %s858 = scalar_lea.sflag [#allocation4], %s857
          %s859 = sand.u32 %s130, 1
          %s860 = smul.addr %s859, 128
          %s861 = scalar_lea.vmem [#allocation3], %s860
          %862 = dma.done %s858, 2048
        $region56: #{gcn_v1_forward.5} parent=51 // pred_fallthru
          _
      $region52: #{gcn_v1_forward.5} parent=5 // pred_fallthru
        _
    $region6: #{gcn_v1_forward.5} parent=1 // loop_footer
      %s17 = sadd.s32 1, %s13
    $region7: #{gcn_v1_forward.5} parent=1 // loop_footer_branch
      %12 = sbr.rel target = $region3
    $region8: #{gcn_v1_forward.5} parent=1 // loop_exit
      _
    %863 = vsyncpa [#allocation4], 1
    %s864 = scalar_lea.sflag [#allocation4], 1
    %865 = vsyncpa %s864, 1

</llo_original>
